<compile_context>
chip_gen: v6e
topology: v6e:2x2x1
jax: 0.10.0
libtpu: 0.0.40
codegen_flags: <defaults>
</compile_context>

<pallas_src>
import functools

import jax
import jax.numpy as jnp
from jax.experimental import pallas as pl
from jax.experimental.pallas import tpu as pltpu

LEAKY_SLOPE = 0.1
BN_EPS = 1e-5
N_DOWN = 4


def _round_up(x, m):
    return (x + m - 1) // m * m


def _default_tile_m():
    # v6e prefers larger row tiles (85%+ roofline at 512 vs 63% at 256).
    try:
        kind = jax.devices()[0].device_kind.lower()
    except Exception:
        return 256
    return 512 if "v6" in kind else 256


# ----------------------------------------------------------------------------
# Pallas kernel: fused  acc += patches @ W ; epilogue: +shift [+res] -> act
# ----------------------------------------------------------------------------
def _gemm_bias_act_kernel(*refs, act, has_residual):
    if has_residual:
        p_ref, w_ref, t_ref, r_ref, o_ref, acc_ref = refs
    else:
        p_ref, w_ref, t_ref, o_ref, acc_ref = refs
        r_ref = None

    k = pl.program_id(1)

    @pl.when(k == 0)
    def _():
        acc_ref[...] = jnp.zeros_like(acc_ref)

    # bf16 operands, f32 accumulation on the MXU.
    acc_ref[...] += jnp.dot(p_ref[...], w_ref[...],
                            preferred_element_type=jnp.float32)

    @pl.when(k == pl.num_programs(1) - 1)
    def _():
        y = acc_ref[...] + t_ref[...]          # BN/bias folded to per-channel shift
        if r_ref is not None:
            y = y + r_ref[...]                 # residual add (ResnetBlock)
        if act == "leaky_relu":
            y = jnp.where(y >= 0, y, LEAKY_SLOPE * y)
        elif act == "tanh":
            y = jnp.tanh(y)
        o_ref[...] = y.astype(o_ref.dtype)


def gemm_bias_act(patches, wmat, shift, *, act, residual=None,
                  tile_m=None, tile_k=1024):
    """patches:(M,K), wmat:(K,N) (BN scale already folded), shift:(N,),
    residual:(M,N) f32.  Returns (M,N) f32."""
    if tile_m is None:
        tile_m = _default_tile_m()
    M, K = patches.shape
    N = wmat.shape[1]

    # Lane-dense output: pad N up to a multiple of 128.
    Np = _round_up(N, 128)
    # Row tiling: pad M to a multiple of the tile (keeps pipelining, no
    # single-huge-block fallback).
    nm = pl.cdiv(M, tile_m)
    tm = _round_up(pl.cdiv(M, nm), 8)
    Mp = nm * tm
    # K tiling with an f32 accumulator bounds VMEM (v7x has only 64 MiB).
    nk = pl.cdiv(K, tile_k)
    tk = _round_up(pl.cdiv(K, nk), 128)
    Kp = nk * tk

    p = jnp.pad(patches, ((0, Mp - M), (0, Kp - K))).astype(jnp.bfloat16)
    w = jnp.pad(wmat, ((0, Kp - K), (0, Np - N))).astype(jnp.bfloat16)
    t = jnp.pad(shift.reshape(1, -1).astype(jnp.float32),
                ((0, 0), (0, Np - N)))

    args = [p, w, t]
    in_specs = [
        pl.BlockSpec((tm, tk), lambda i, k: (i, k)),
        pl.BlockSpec((tk, Np), lambda i, k: (k, 0)),
        pl.BlockSpec((1, Np), lambda i, k: (0, 0)),
    ]
    if residual is not None:
        r = jnp.pad(residual.astype(jnp.float32),
                    ((0, Mp - M), (0, Np - N)))
        args.append(r)
        in_specs.append(pl.BlockSpec((tm, Np), lambda i, k: (i, 0)))

    kernel = functools.partial(_gemm_bias_act_kernel, act=act,
                               has_residual=residual is not None)

    out = pl.pallas_call(
        kernel,
        grid=(Mp // tm, Kp // tk),
        out_shape=jax.ShapeDtypeStruct((Mp, Np), jnp.float32),
        in_specs=in_specs,
        out_specs=pl.BlockSpec((tm, Np), lambda i, k: (i, 0)),
        scratch_shapes=[pltpu.VMEM((tm, Np), jnp.float32)],
        compiler_params=pltpu.CompilerParams(
            dimension_semantics=("parallel", "arbitrary"),
            vmem_limit_bytes=64 * 1024 * 1024),
    )(*args)
    return out[:M, :N]


# ----------------------------------------------------------------------------
# JAX glue: NHWC padding / im2col / weight+BN folding (no compute hot path)
# ----------------------------------------------------------------------------
def im2col_nhwc(x, kh, kw, stride):
    """x: (B, Hp, Wp, C) already padded -> (B*Ho*Wo, kh*kw*C), Ho, Wo."""
    B, Hp, Wp, C = x.shape
    Ho = (Hp - kh) // stride + 1
    Wo = (Wp - kw) // stride + 1
    cols = []
    for i in range(kh):
        for j in range(kw):
            cols.append(x[:,
                          i:i + (Ho - 1) * stride + 1:stride,
                          j:j + (Wo - 1) * stride + 1:stride, :])
    patches = jnp.concatenate(cols, axis=-1)          # (B, Ho, Wo, kh*kw*C)
    return patches.reshape(B * Ho * Wo, kh * kw * C), Ho, Wo


def _bn_fold(p, cout, use_bn):
    """Return (scale, shift): conv(x)+b then BN  ==  x@(W*scale) + shift."""
    if use_bn:
        s = p["gamma"] / jnp.sqrt(p["var"] + BN_EPS)
        t = (p["b"] - p["mean"]) * s + p["beta"]
    else:
        s = jnp.ones((cout,), jnp.float32)
        t = p["b"]
    return s, t


def conv_bn_act(x, p, *, k, stride, pad, pad_mode, act,
                residual=None, use_bn=True):
    """x: (B, H, W, Cin) NHWC.  Conv(k,k,stride) + folded BN + bias + act."""
    B = x.shape[0]
    x = x.astype(jnp.bfloat16)                        # bf16 im2col stream
    if pad > 0:
        mode = "reflect" if pad_mode == "reflect" else "constant"
        x = jnp.pad(x, ((0, 0), (pad, pad), (pad, pad), (0, 0)), mode=mode)
    patches, Ho, Wo = im2col_nhwc(x, k, k, stride)

    w = p["w"]                                        # (Cout, Cin, k, k)
    Cout, Cin = w.shape[0], w.shape[1]
    wmat = w.transpose(2, 3, 1, 0).reshape(k * k * Cin, Cout)  # (kh,kw,Cin)->rows
    scale, shift = _bn_fold(p, Cout, use_bn)
    wmat = wmat * scale[None, :]                      # fold BN scale into W

    res_mat = None
    if residual is not None:                          # NHWC: plain reshape
        res_mat = residual.reshape(B * Ho * Wo, Cout)

    out = gemm_bias_act(patches, wmat, shift, act=act, residual=res_mat)
    return out.reshape(B, Ho, Wo, Cout)


def convtranspose_bn_act(x, p, *, act):
    """ConvTranspose2d(k=3, s=2, p=1, output_padding=1) + BN + act, NHWC,
    via the sub-pixel (4-phase) decomposition (no zero-inserted input)."""
    B, H, W, Cin = x.shape
    wt = p["w"]                                       # (Cin, Cout, 3, 3)
    Cout = wt.shape[1]
    scale, shift = _bn_fold(p, Cout, use_bn=True)

    xb = x.astype(jnp.bfloat16)
    xp = jnp.pad(xb, ((0, 0), (0, 1), (0, 1), (0, 0)))   # zero row/col at end

    def tap(di, dj):                                  # x[i+di, j+dj]  (B,H,W,Cin)
        return xp[:, di:di + H, dj:dj + W, :]

    def phase(taps):                                  # taps: list of (di,dj,ky,kx)
        patches = jnp.concatenate([tap(di, dj) for (di, dj, _, _) in taps],
                                  axis=-1).reshape(B * H * W, -1)
        wm = jnp.concatenate([wt[:, :, ky, kx] for (_, _, ky, kx) in taps],
                             axis=0) * scale[None, :]
        out = gemm_bias_act(patches, wm, shift, act=act)
        return out.reshape(B, H, W, Cout)

    # out[2i  ,2j  ] = x[i  ,j  ]*w[1,1]
    # out[2i  ,2j+1] = x[i  ,j+1]*w[1,0] + x[i  ,j]*w[1,2]
    # out[2i+1,2j  ] = x[i+1,j  ]*w[0,1] + x[i  ,j]*w[2,1]
    # out[2i+1,2j+1] = x[i+1,j+1]*w[0,0] + x[i+1,j]*w[0,2]
    #                + x[i  ,j+1]*w[2,0] + x[i  ,j]*w[2,2]
    ee = phase([(0, 0, 1, 1)])
    eo = phase([(0, 1, 1, 0), (0, 0, 1, 2)])
    oe = phase([(1, 0, 0, 1), (0, 0, 2, 1)])
    oo = phase([(1, 1, 0, 0), (1, 0, 0, 2), (0, 1, 2, 0), (0, 0, 2, 2)])

    row0 = jnp.stack([ee, eo], axis=3)                # (B,H,W,2,C)  col parity
    row1 = jnp.stack([oe, oo], axis=3)
    y = jnp.stack([row0, row1], axis=2)               # (B,H,2,W,2,C) row parity
    return y.reshape(B, 2 * H, 2 * W, Cout)


# ----------------------------------------------------------------------------
# Parameters (deterministic synthetic init, PyTorch shapes)
# ----------------------------------------------------------------------------
def _conv_params(key, cout, cin, k, transpose=False):
    kw, kb = jax.random.split(key)
    wshape = (cin, cout, k, k) if transpose else (cout, cin, k, k)
    return {
        "w": jax.random.normal(kw, wshape, jnp.float32) * 0.05,
        "b": jax.random.normal(kb, (cout,), jnp.float32) * 0.05,
        "gamma": jnp.ones((cout,), jnp.float32),
        "beta": jnp.zeros((cout,), jnp.float32),
        "mean": jnp.zeros((cout,), jnp.float32),
        "var": jnp.ones((cout,), jnp.float32),
    }


def init_params(key, input_nc, output_nc, ngf, n_down=N_DOWN):
    keys = jax.random.split(key, 2 * n_down + 4)
    ki = iter(keys)
    params = {"head": _conv_params(next(ki), ngf, input_nc, 7)}
    for i in range(n_down):
        mult = 2 ** i
        params[f"down{i}"] = _conv_params(next(ki), ngf * mult * 2, ngf * mult, 3)
    mult = 2 ** n_down
    params["res_conv1"] = _conv_params(next(ki), ngf * mult, ngf * mult, 3)
    params["res_conv2"] = _conv_params(next(ki), ngf * mult, ngf * mult, 3)
    for i in range(n_down):
        mult = 2 ** (n_down - i)
        params[f"up{i}"] = _conv_params(
            next(ki), ngf * mult // 2, ngf * mult, 3, transpose=True)
    params["tail"] = _conv_params(next(ki), output_nc, ngf, 7)
    return params


# ----------------------------------------------------------------------------
# Tex2Cloth forward
# ----------------------------------------------------------------------------
def tex2cloth_forward(params, unlit, normal, lit, n_down=N_DOWN):
    x = jnp.concatenate([unlit, normal, lit], axis=1)      # (B, C, H, W)
    x = x.transpose(0, 2, 3, 1)                            # NHWC end-to-end

    # ReflectionPad2d(3) -> Conv7x7 -> BN -> LeakyReLU
    x = conv_bn_act(x, params["head"], k=7, stride=1, pad=3,
                    pad_mode="reflect", act="leaky_relu")
    # Downsampling: Conv3x3 stride 2 pad 1 -> BN -> LeakyReLU
    for i in range(n_down):
        x = conv_bn_act(x, params[f"down{i}"], k=3, stride=2, pad=1,
                        pad_mode="zero", act="leaky_relu")
    # ResnetBlock (reflect pad): conv-BN-act, conv-BN, + residual
    res_in = x
    y = conv_bn_act(x, params["res_conv1"], k=3, stride=1, pad=1,
                    pad_mode="reflect", act="leaky_relu")
    x = conv_bn_act(y, params["res_conv2"], k=3, stride=1, pad=1,
                    pad_mode="reflect", act="none", residual=res_in)
    # Upsampling: ConvTranspose3x3 s2 p1 op1 -> BN -> LeakyReLU
    for i in range(n_down):
        x = convtranspose_bn_act(x, params[f"up{i}"], act="leaky_relu")
    # ReflectionPad2d(3) -> Conv7x7 -> Tanh   (no BN on the tail)
    x = conv_bn_act(x, params["tail"], k=7, stride=1, pad=3,
                    pad_mode="reflect", act="tanh", use_bn=False)
    return x.transpose(0, 3, 1, 2)                          # back to NCHW


# ----------------------------------------------------------------------------
if __name__ == "__main__":
    B, H, W = 1, 32, 32                 # H, W divisible by 2**n_down = 16
    c_unlit, c_normal, c_lit = 3, 3, 3
    input_nc = c_unlit + c_normal + c_lit
    output_nc = 3
    ngf = 8

    key = jax.random.PRNGKey(0)
    k1, k2, k3, kp = jax.random.split(key, 4)
    unlit = jax.random.normal(k1, (B, c_unlit, H, W), jnp.float32)
    normal = jax.random.normal(k2, (B, c_normal, H, W), jnp.float32)
    lit = jax.random.normal(k3, (B, c_lit, H, W), jnp.float32)

    params = init_params(kp, input_nc, output_nc, ngf)

    out = tex2cloth_forward(params, unlit, normal, lit)
    out = jax.block_until_ready(out)

    assert out.shape == (B, output_nc, H, W), out.shape
    assert bool(jnp.all(jnp.isfinite(out)))
    assert bool(jnp.all(jnp.abs(out) <= 1.0 + 1e-6))        # tanh range
    print("KERNEL_OK")
</pallas_src>

<mosaic_0001>
module attributes {stable_mosaic.version = 11 : i64} {
  func.func @_gemm_bias_act_kernel(%arg0: i32, %arg1: i32, %arg2: memref<256x512xbf16, #tpu.memory_space<vmem>>, %arg3: memref<512x128xbf16, #tpu.memory_space<vmem>>, %arg4: memref<1x128xf32, #tpu.memory_space<vmem>>, %arg5: memref<256x128xf32, #tpu.memory_space<vmem>>, %arg6: memref<256x128xf32, #tpu.memory_space<vmem>>) attributes {dimension_semantics = [#tpu.dimension_semantics<parallel>, #tpu.dimension_semantics<arbitrary>], iteration_bounds = array<i64: 4, 1>, scalar_prefetch = 0 : i64, scratch_operands = 1 : i64, tpu.core_type = #tpu.core_type<tc>, window_params = [{transform_indices = @transform_0, window_bounds = array<i64: 256, 512>}, {transform_indices = @transform_1, window_bounds = array<i64: 512, 128>}, {pipeline_mode = #tpu.pipeline_mode<synchronous>, transform_indices = @transform_2, window_bounds = array<i64: 1, 128>}, {transform_indices = @transform_3, window_bounds = array<i64: 256, 128>}]} {
    %c0_i32 = arith.constant 0 : i32
    %0 = arith.cmpi eq, %arg1, %c0_i32 : i32
    %1 = arith.extui %0 : i1 to i32
    %c0_i32_0 = arith.constant 0 : i32
    %2 = arith.cmpi ne, %1, %c0_i32_0 : i32
    scf.if %2 {
      %cst_10 = arith.constant 0.000000e+00 : f32
      %12 = vector.broadcast %cst_10 : f32 to vector<256x128xf32>
      %c0_11 = arith.constant 0 : index
      %c0_12 = arith.constant 0 : index
      %13 = vector.load %arg6[%c0_11, %c0_12] : memref<256x128xf32, #tpu.memory_space<vmem>>, vector<256x128xf32>
      tpu.vector_store %arg6[%c0_11, %c0_12], %12 {strides = array<i32>} : memref<256x128xf32, #tpu.memory_space<vmem>>, vector<256x128xf32>,
    } else {
    }
    %c0 = arith.constant 0 : index
    %c0_1 = arith.constant 0 : index
    %3 = vector.load %arg6[%c0, %c0_1] : memref<256x128xf32, #tpu.memory_space<vmem>>, vector<256x128xf32>
    %c0_2 = arith.constant 0 : index
    %c0_3 = arith.constant 0 : index
    %4 = vector.load %arg2[%c0_2, %c0_3] : memref<256x512xbf16, #tpu.memory_space<vmem>>, vector<256x512xbf16>
    %c0_4 = arith.constant 0 : index
    %c0_5 = arith.constant 0 : index
    %5 = vector.load %arg3[%c0_4, %c0_5] : memref<512x128xbf16, #tpu.memory_space<vmem>>, vector<512x128xbf16>
    %cst = arith.constant dense<0.000000e+00> : vector<256x128xf32>
    %6 = tpu.matmul %4, %5, %cst {dimension_numbers = #tpu.dot_dimension_numbers<[1], [0], [0], [1], [0, 0, 1, 1], [], []>} : vector<256x512xbf16>, vector<512x128xbf16>, vector<256x128xf32> -> vector<256x128xf32>
    %7 = arith.addf %3, %6 : vector<256x128xf32>
    %c0_6 = arith.constant 0 : index
    %c0_7 = arith.constant 0 : index
    %8 = vector.load %arg6[%c0_6, %c0_7] : memref<256x128xf32, #tpu.memory_space<vmem>>, vector<256x128xf32>
    tpu.vector_store %arg6[%c0_6, %c0_7], %7 {strides = array<i32>} : memref<256x128xf32, #tpu.memory_space<vmem>>, vector<256x128xf32>,
    %c0_i32_8 = arith.constant 0 : i32
    %9 = arith.cmpi eq, %arg1, %c0_i32_8 : i32
    %10 = arith.extui %9 : i1 to i32
    %c0_i32_9 = arith.constant 0 : i32
    %11 = arith.cmpi ne, %10, %c0_i32_9 : i32
    scf.if %11 {
      %c0_10 = arith.constant 0 : index
      %c0_11 = arith.constant 0 : index
      %12 = vector.load %arg6[%c0_10, %c0_11] : memref<256x128xf32, #tpu.memory_space<vmem>>, vector<256x128xf32>
      %c0_12 = arith.constant 0 : index
      %c0_13 = arith.constant 0 : index
      %13 = vector.load %arg4[%c0_12, %c0_13] : memref<1x128xf32, #tpu.memory_space<vmem>>, vector<1x128xf32>
      %14 = vector.broadcast %13 : vector<1x128xf32> to vector<256x128xf32>
      %15 = arith.addf %12, %14 : vector<256x128xf32>
      %cst_14 = arith.constant 0.000000e+00 : f32
      %16 = vector.broadcast %cst_14 : f32 to vector<256x128xf32>
      %17 = arith.cmpf oge, %15, %16 : vector<256x128xf32>
      %cst_15 = arith.constant 1.000000e-01 : f32
      %18 = vector.broadcast %cst_15 : f32 to vector<256x128xf32>
      %19 = arith.mulf %18, %15 : vector<256x128xf32>
      %20 = arith.select %17, %15, %19 : vector<256x128xi1>, vector<256x128xf32>
      %c0_16 = arith.constant 0 : index
      %c0_17 = arith.constant 0 : index
      %21 = vector.load %arg5[%c0_16, %c0_17] : memref<256x128xf32, #tpu.memory_space<vmem>>, vector<256x128xf32>
      tpu.vector_store %arg5[%c0_16, %c0_17], %20 {strides = array<i32>} : memref<256x128xf32, #tpu.memory_space<vmem>>, vector<256x128xf32>,
    } else {
    }
    return
  }
  func.func @transform_0(%arg0: i32, %arg1: i32) -> (i32, i32) {
    %c0_i32 = arith.constant 0 : i32
    return %arg0, %arg1 : i32, i32
  }
  func.func @transform_1(%arg0: i32, %arg1: i32) -> (i32, i32) {
    %c0_i32 = arith.constant 0 : i32
    %c0_i32_0 = arith.constant 0 : i32
    return %arg1, %c0_i32 : i32, i32
  }
  func.func @transform_2(%arg0: i32, %arg1: i32) -> (i32, i32) {
    %c0_i32 = arith.constant 0 : i32
    %c0_i32_0 = arith.constant 0 : i32
    %c0_i32_1 = arith.constant 0 : i32
    return %c0_i32, %c0_i32_0 : i32, i32
  }
  func.func @transform_3(%arg0: i32, %arg1: i32) -> (i32, i32) {
    %c0_i32 = arith.constant 0 : i32
    %c0_i32_0 = arith.constant 0 : i32
    return %arg0, %c0_i32 : i32, i32
  }
}

</mosaic_0001>

<llo_original>
// kernel: tpu_custom_call.1
$region0: #{tpu_custom_call.1}
  #allocation0 [shape = 'u32[]', space=smem, size = 0x4, offset = 0x4, fixed_abs, tag = 'smem constant byte address 0x4 - core index']
  #allocation1 [shape = 'u32[144,128]{1,0:T(1,128)}', space=vmem, size = 0x12000, scoped, tag = 'internal scratch']
  #allocation2 [shape = 'f32[256,128]{1,0:T(8,128)}', space=vmem, size = 0x20000, scoped, tag = 'scratch operand']
  %s0 = inlined_call_operand.hbm [shape: bf16[1024,512], index: 0, kind: input, shape index: {}]
  %s1 = inlined_call_operand.hbm [shape: bf16[512,128], index: 1, kind: input, shape index: {}]
  %s2 = inlined_call_operand.vmem [shape: f32[1,128], index: 2, kind: input, shape index: {}]
  %s3 = inlined_call_operand.hbm [shape: f32[1024,128], index: 3, kind: output, shape index: {}]
  %s4 = sld [smem:[#allocation0]]
  $region61: #{tpu_custom_call.1} parent=0
    _
  %s6 = ssub.s32 1, %s4
  %s7 = scalar_select 0, %s6, %s4
  $region1: #{tpu_custom_call.1} parent=0
    #allocation3 [shape = 'u8[524288]{0}', space=vmem, size = 0x80000, scoped, tag = 'input window, operand 0']
    #allocation4 [shape = 's32[2]{0}', space=sflag, size = 0x8, scoped, tag = 'scoped memory for tpu_custom_call.1']
    #allocation5 [shape = 's32[2]{0}', space=sflag, size = 0x8, scoped, tag = 'scoped memory for tpu_custom_call.1']
    #allocation6 [shape = 'u8[131072]{0}', space=vmem, size = 0x20000, scoped, tag = 'input window, operand 1, single buffered']
    #allocation7 [shape = 's32[1]{0}', space=sflag, size = 0x4, scoped, tag = 'scoped memory for tpu_custom_call.1']
    #allocation8 [shape = 'u8[262144]{0}', space=vmem, size = 0x40000, scoped, tag = 'output window, operand 0']
    %8 = vsyncpa [#allocation4], 0
    %s9 = scalar_lea.sflag [#allocation4], 1
    %10 = vsyncpa %s9, 0
    %11 = vsyncpa [#allocation7], 0
    %12 = vsyncpa [#allocation5], 0
    %s13 = scalar_lea.sflag [#allocation5], 1
    %14 = vsyncpa %s13, 0
    loop: start=0, step=1, limit=6
    $region2: #{tpu_custom_call.1} parent=1 // loop_pre_header
      _
    $region3: #{tpu_custom_call.1} parent=1 // loop_header
      %s16 = sphi 0, %s20
      %p17 = scmp.ge.s32.totalorder %s16, 6
      %s23 = sphi 0, %s35
      %s24 = sphi 0, %s31
      %s25 = sphi 0, %s23
      %s26 = sphi 0, %s24
      %s27 = sphi 0, %s25
      %s28 = sphi 0, %s26
      %s40 = sphi 0, %s42
      %s43 = sphi 0, %s40
      %s44 = sphi 0, %s43
      %s60 = sphi 0, %s44
      %s66 = sphi 0, %s68
      %s69 = sphi 0, %s66
      %s70 = sphi 0, %s69
      %s86 = sphi 0, %s70
      %s90 = sphi 0, %s90
      %s92 = sphi 0, %s90
      %s93 = sphi 0, %s92
      %s107 = sphi 0, %s93
      %s113 = sphi 0, %s115
      %s116 = sphi 0, %s113
      %s117 = sphi 0, %s116
      %s133 = sphi 0, %s117
    $region4: #{tpu_custom_call.1} parent=1 // loop_header_branch
      %19 = sbr.rel (%p17) target = $region8
    $region5: #{tpu_custom_call.1} parent=1 // loop_body
      %s21 = ssub.s32 %s16, 1
      %s22 = ssub.s32 %s16, 2
      %s29 = sadd.s32 1, %s24
      %p30 = scmp.ge.s32.totalorder %s29, 1
      %s31 = scalar_select %p30, 0, %s29
      %s32 = sadd.s32 1, %s23
      %s33 = scalar_select %p30, %s32, %s23
      %p34 = scmp.ge.s32.totalorder %s33, 4
      %s35 = scalar_select %p34, 0, %s33
      %s36 = ssub.s32 %s23, %s35
      %s37 = ssub.s32 %s24, %s31
      %s38 = sor.u32 %s36, %s37
      %p39 = scmp.eq.s32.totalorder %s38, 0
      %s41 = sadd.s32 %s40, 1
      %s42 = scalar_select %p39, %s40, %s41
      %p45 = pneg %p39
      %p46 = scmp.eq.s32.totalorder %s16, 3
      %p47 = por %p45, %p46
      %p48 = scmp.ne.s32.totalorder %s40, %s43
      %p49 = scmp.eq.s32.totalorder %s16, 0
      %p50 = por %p48, %p49
      %p51 = scmp.ne.s32.totalorder %s40, %s43
      %p52 = scmp.eq.s32.totalorder %s21, 3
      %p53 = por %p51, %p52
      %p54 = scmp.ne.s32.totalorder %s43, %s44
      %p55 = scmp.eq.s32.totalorder %s21, 0
      %p56 = por %p54, %p55
      %p57 = scmp.ne.s32.totalorder %s43, %s44
      %p58 = scmp.eq.s32.totalorder %s22, 3
      %p59 = por %p57, %p58
      %p61 = scmp.ne.s32.totalorder %s44, %s60
      %p62 = scmp.eq.s32.totalorder %s22, 0
      %p63 = por %p61, %p62
      %s64 = ssub.s32 %s24, %s31
      %p65 = scmp.eq.s32.totalorder %s64, 0
      %s67 = sadd.s32 %s66, 1
      %s68 = scalar_select %p65, %s66, %s67
      %p71 = pneg %p65
      %p72 = scmp.eq.s32.totalorder %s16, 3
      %p73 = por %p71, %p72
      %p74 = scmp.ne.s32.totalorder %s66, %s69
      %p75 = scmp.eq.s32.totalorder %s16, 0
      %p76 = por %p74, %p75
      %p77 = scmp.ne.s32.totalorder %s66, %s69
      %p78 = scmp.eq.s32.totalorder %s21, 3
      %p79 = por %p77, %p78
      %p80 = scmp.ne.s32.totalorder %s69, %s70
      %p81 = scmp.eq.s32.totalorder %s21, 0
      %p82 = por %p80, %p81
      %p83 = scmp.ne.s32.totalorder %s69, %s70
      %p84 = scmp.eq.s32.totalorder %s22, 3
      %p85 = por %p83, %p84
      %p87 = scmp.ne.s32.totalorder %s70, %s86
      %p88 = scmp.eq.s32.totalorder %s22, 0
      %p89 = por %p87, %p88
      %s91 = sadd.s32 %s90, 1
      %p94 = scmp.eq.s32.totalorder %s16, 3
      %p95 = scmp.ne.s32.totalorder %s90, %s92
      %p96 = scmp.eq.s32.totalorder %s16, 0
      %p97 = por %p95, %p96
      %p98 = scmp.ne.s32.totalorder %s90, %s92
      %p99 = scmp.eq.s32.totalorder %s21, 3
      %p100 = por %p98, %p99
      %p101 = scmp.ne.s32.totalorder %s92, %s93
      %p102 = scmp.eq.s32.totalorder %s21, 0
      %p103 = por %p101, %p102
      %p104 = scmp.ne.s32.totalorder %s92, %s93
      %p105 = scmp.eq.s32.totalorder %s22, 3
      %p106 = por %p104, %p105
      %p108 = scmp.ne.s32.totalorder %s93, %s107
      %p109 = scmp.eq.s32.totalorder %s22, 0
      %p110 = por %p108, %p109
      %s111 = ssub.s32 %s23, %s35
      %p112 = scmp.eq.s32.totalorder %s111, 0
      %s114 = sadd.s32 %s113, 1
      %s115 = scalar_select %p112, %s113, %s114
      %p118 = pneg %p112
      %p119 = scmp.eq.s32.totalorder %s16, 3
      %p120 = por %p118, %p119
      %p121 = scmp.ne.s32.totalorder %s113, %s116
      %p122 = scmp.eq.s32.totalorder %s16, 0
      %p123 = por %p121, %p122
      %p124 = scmp.ne.s32.totalorder %s113, %s116
      %p125 = scmp.eq.s32.totalorder %s21, 3
      %p126 = por %p124, %p125
      %p127 = scmp.ne.s32.totalorder %s116, %s117
      %p128 = scmp.eq.s32.totalorder %s21, 0
      %p129 = por %p127, %p128
      %p130 = scmp.ne.s32.totalorder %s116, %s117
      %p131 = scmp.eq.s32.totalorder %s22, 3
      %p132 = por %p130, %p131
      %p134 = scmp.ne.s32.totalorder %s117, %s133
      %p135 = scmp.eq.s32.totalorder %s22, 0
      %p136 = por %p134, %p135
      %p137 = scmp.le.s32.totalorder 1, %s16
      %p138 = scmp.lt.s32.totalorder %s16, 5
      %p139 = pnand %p137, %p138
      %p140 = pneg %p139
      // Predicated region
      $region9: #{tpu_custom_call.1} parent=5 // pred_check
        _
      $region10: #{tpu_custom_call.1} parent=5 // pred_check_branch
        %142 = sbr.rel (%p139) target = $region12
      $region11: #{tpu_custom_call.1} parent=5 // pred_region
        %s143 = ssub.s32 %s16, 1
        // Predicated region
        $region13: #{tpu_custom_call.1} parent=11 // pred_check
          %p144 = pneg %p82
        $region14: #{tpu_custom_call.1} parent=11 // pred_check_branch
          %146 = sbr.rel (%p144) target = $region16
        $region15: #{tpu_custom_call.1} parent=11 // pred_region
          %s147 = smul.u32 64, %s26
          %s149 = ssub.s32 4096, 4096
          %150 = vsyncadd [#allocation7], %s149
          %s151 = smul.addr %s147, 64
          %s152 = scalar_lea.hbm %s1, %s151
          %s153 = sshll.u32 [#allocation6], 4
          %s154 = int_to_ptr.vmem [resolvable:$true] %s153
          %159 = dma.hbm_to_vmem [thread:$0]  %s152, 4096, %s154, [#allocation7], 64, 64, 4
        $region16: #{tpu_custom_call.1} parent=11 // pred_fallthru
          _
        // Predicated region
        $region17: #{tpu_custom_call.1} parent=11 // pred_check
          %p160 = pneg %p103
        $region18: #{tpu_custom_call.1} parent=11 // pred_check_branch
          %162 = sbr.rel (%p160) target = $region20
        $region19: #{tpu_custom_call.1} parent=11 // pred_region
          _
        $region20: #{tpu_custom_call.1} parent=11 // pred_fallthru
          _
      $region12: #{tpu_custom_call.1} parent=5 // pred_fallthru
        _
      %p163 = scmp.lt.s32.totalorder %s16, 4
      // Predicated region
      $region21: #{tpu_custom_call.1} parent=5 // pred_check
        %p164 = pneg %p163
      $region22: #{tpu_custom_call.1} parent=5 // pred_check_branch
        %166 = sbr.rel (%p164) target = $region24
      $region23: #{tpu_custom_call.1} parent=5 // pred_region
        // Predicated region
        $region25: #{tpu_custom_call.1} parent=23 // pred_check
          %p167 = pneg %p50
        $region26: #{tpu_custom_call.1} parent=23 // pred_check_branch
          %169 = sbr.rel (%p167) target = $region28
        $region27: #{tpu_custom_call.1} parent=23 // pred_region
          %s170 = sand.u32 %s40, 1
          %s171 = scalar_lea.sflag [#allocation4], %s170
          %s172 = sand.u32 %s40, 1
          %s173 = smul.addr %s172, 512
          %s174 = scalar_lea.vmem [#allocation3], %s173
          %s175 = smul.u32 32, %s23
          %s176 = smul.u32 4, %s24
          %s178 = ssub.s32 8192, 8192
          %179 = vsyncadd %s171, %s178
          %s180 = smul.addr %s175, 4
          %s181 = sadd.s32 %s176, %s180
          %s182 = smul.addr %s181, 64
          %s183 = scalar_lea.hbm %s0, %s182
          %s184 = sshll.u32 %s174, 4
          %s185 = int_to_ptr.vmem [resolvable:$true] %s184
          %190 = dma.hbm_to_vmem [thread:$0]  %s183, 8192, %s185, %s171, 256, 256, 16
        $region28: #{tpu_custom_call.1} parent=23 // pred_fallthru
          _
      $region24: #{tpu_custom_call.1} parent=5 // pred_fallthru
        _
      %p191 = scmp.le.s32.totalorder 1, %s16
      %p192 = scmp.lt.s32.totalorder %s16, 5
      %p193 = pnand %p191, %p192
      %p194 = pneg %p193
      // Predicated region
      $region29: #{tpu_custom_call.1} parent=5 // pred_check
        _
      $region30: #{tpu_custom_call.1} parent=5 // pred_check_branch
        %196 = sbr.rel (%p193) target = $region32
      $region31: #{tpu_custom_call.1} parent=5 // pred_region
        %s197 = ssub.s32 %s16, 1
        %s198 = sand.u32 %s43, 1
        %s199 = scalar_lea.sflag [#allocation4], %s198
        %s200 = sand.u32 %s43, 1
        %s201 = smul.addr %s200, 512
        %s202 = scalar_lea.vmem [#allocation3], %s201
        // Predicated region
        $region33: #{tpu_custom_call.1} parent=31 // pred_check
          %p203 = pneg %p56
        $region34: #{tpu_custom_call.1} parent=31 // pred_check_branch
          %205 = sbr.rel (%p203) target = $region36
        $region35: #{tpu_custom_call.1} parent=31 // pred_region
          %206 = dma.done %s199, 8192
        $region36: #{tpu_custom_call.1} parent=31 // pred_fallthru
          _
        // Predicated region
        $region37: #{tpu_custom_call.1} parent=31 // pred_check
          %p207 = pneg %p82
        $region38: #{tpu_custom_call.1} parent=31 // pred_check_branch
          %209 = sbr.rel (%p207) target = $region40
        $region39: #{tpu_custom_call.1} parent=31 // pred_region
          %210 = dma.done [#allocation7], 4096
        $region40: #{tpu_custom_call.1} parent=31 // pred_fallthru
          _
        %s211 = sand.u32 %s43, 1
        %s212 = scalar_lea.sflag [#allocation4], %s211
        %s213 = sand.u32 %s43, 1
        %s214 = smul.addr %s213, 512
        %s215 = scalar_lea.vmem [#allocation3], %s214
        %p216 = pneg %p56
        %p217 = pneg %p53
        %p218 = pneg %p82
        %p219 = pneg %p79
        %p220 = pneg %p103
        %p221 = pneg %p100
        %p222 = pneg %p129
        %p223 = pneg %p126
        %s224 = sand.u32 %s116, 1
        %s225 = scalar_lea.sflag [#allocation5], %s224
        %s226 = sand.u32 %s116, 1
        %s227 = smul.addr %s226, 256
        %s228 = scalar_lea.vmem [#allocation8], %s227
        %s229 = smul.u32 32, %s25
        %s230 = smul.u32 4, %s26
        %s231 = smul.u32 64, %s26
        %s232 = smul.u32 32, %s25
        %p234 = scmp.eq.s32.totalorder %s26, 0
        // Predicated region
        $region41: #{tpu_custom_call.1} parent=31 // pred_check
          %p235 = pneg %p234
        $region42: #{tpu_custom_call.1} parent=31 // pred_check_branch
          %237 = sbr.rel (%p235) target = $region44
        $region43: #{tpu_custom_call.1} parent=31 // pred_region
          %238 = vst [vmem:[#allocation2] sm:$0xff] 0.0
          %239 = vst [vmem:[#allocation2 + $0x8] sm:$0xff] 0.0
          %240 = vst [vmem:[#allocation2 + $0x10] sm:$0xff] 0.0
          %241 = vst [vmem:[#allocation2 + $0x18] sm:$0xff] 0.0
          %242 = vst [vmem:[#allocation2 + $0x20] sm:$0xff] 0.0
          %243 = vst [vmem:[#allocation2 + $0x28] sm:$0xff] 0.0
          %244 = vst [vmem:[#allocation2 + $0x30] sm:$0xff] 0.0
          %245 = vst [vmem:[#allocation2 + $0x38] sm:$0xff] 0.0
          %246 = vst [vmem:[#allocation2 + $0x40] sm:$0xff] 0.0
          %247 = vst [vmem:[#allocation2 + $0x48] sm:$0xff] 0.0
          %248 = vst [vmem:[#allocation2 + $0x50] sm:$0xff] 0.0
          %249 = vst [vmem:[#allocation2 + $0x58] sm:$0xff] 0.0
          %250 = vst [vmem:[#allocation2 + $0x60] sm:$0xff] 0.0
          %251 = vst [vmem:[#allocation2 + $0x68] sm:$0xff] 0.0
          %252 = vst [vmem:[#allocation2 + $0x70] sm:$0xff] 0.0
          %253 = vst [vmem:[#allocation2 + $0x78] sm:$0xff] 0.0
          %254 = vst [vmem:[#allocation2 + $0x80] sm:$0xff] 0.0
          %255 = vst [vmem:[#allocation2 + $0x88] sm:$0xff] 0.0
          %256 = vst [vmem:[#allocation2 + $0x90] sm:$0xff] 0.0
          %257 = vst [vmem:[#allocation2 + $0x98] sm:$0xff] 0.0
          %258 = vst [vmem:[#allocation2 + $0xa0] sm:$0xff] 0.0
          %259 = vst [vmem:[#allocation2 + $0xa8] sm:$0xff] 0.0
          %260 = vst [vmem:[#allocation2 + $0xb0] sm:$0xff] 0.0
          %261 = vst [vmem:[#allocation2 + $0xb8] sm:$0xff] 0.0
          %262 = vst [vmem:[#allocation2 + $0xc0] sm:$0xff] 0.0
          %263 = vst [vmem:[#allocation2 + $0xc8] sm:$0xff] 0.0
          %264 = vst [vmem:[#allocation2 + $0xd0] sm:$0xff] 0.0
          %265 = vst [vmem:[#allocation2 + $0xd8] sm:$0xff] 0.0
          %266 = vst [vmem:[#allocation2 + $0xe0] sm:$0xff] 0.0
          %267 = vst [vmem:[#allocation2 + $0xe8] sm:$0xff] 0.0
          %268 = vst [vmem:[#allocation2 + $0xf0] sm:$0xff] 0.0
          %269 = vst [vmem:[#allocation2 + $0xf8] sm:$0xff] 0.0
        $region44: #{tpu_custom_call.1} parent=31 // pred_fallthru
          _
        %v270 = vld [vmem:[#allocation2] sm:$0xff]
        %v271 = vld [vmem:[#allocation2 + $0x8] sm:$0xff]
        %v272 = vld [vmem:[#allocation2 + $0x10] sm:$0xff]
        %v273 = vld [vmem:[#allocation2 + $0x18] sm:$0xff]
        %v274 = vld [vmem:[#allocation2 + $0x20] sm:$0xff]
        %v275 = vld [vmem:[#allocation2 + $0x28] sm:$0xff]
        %v276 = vld [vmem:[#allocation2 + $0x30] sm:$0xff]
        %v277 = vld [vmem:[#allocation2 + $0x38] sm:$0xff]
        %v278 = vld [vmem:[#allocation2 + $0x40] sm:$0xff]
        %v279 = vld [vmem:[#allocation2 + $0x48] sm:$0xff]
        %v280 = vld [vmem:[#allocation2 + $0x50] sm:$0xff]
        %v281 = vld [vmem:[#allocation2 + $0x58] sm:$0xff]
        %v282 = vld [vmem:[#allocation2 + $0x60] sm:$0xff]
        %v283 = vld [vmem:[#allocation2 + $0x68] sm:$0xff]
        %v284 = vld [vmem:[#allocation2 + $0x70] sm:$0xff]
        %v285 = vld [vmem:[#allocation2 + $0x78] sm:$0xff]
        %v286 = vld [vmem:[#allocation2 + $0x80] sm:$0xff]
        %v287 = vld [vmem:[#allocation2 + $0x88] sm:$0xff]
        %v288 = vld [vmem:[#allocation2 + $0x90] sm:$0xff]
        %v289 = vld [vmem:[#allocation2 + $0x98] sm:$0xff]
        %v290 = vld [vmem:[#allocation2 + $0xa0] sm:$0xff]
        %v291 = vld [vmem:[#allocation2 + $0xa8] sm:$0xff]
        %v292 = vld [vmem:[#allocation2 + $0xb0] sm:$0xff]
        %v293 = vld [vmem:[#allocation2 + $0xb8] sm:$0xff]
        %v294 = vld [vmem:[#allocation2 + $0xc0] sm:$0xff]
        %v295 = vld [vmem:[#allocation2 + $0xc8] sm:$0xff]
        %v296 = vld [vmem:[#allocation2 + $0xd0] sm:$0xff]
        %v297 = vld [vmem:[#allocation2 + $0xd8] sm:$0xff]
        %v298 = vld [vmem:[#allocation2 + $0xe0] sm:$0xff]
        %v299 = vld [vmem:[#allocation2 + $0xe8] sm:$0xff]
        %v300 = vld [vmem:[#allocation2 + $0xf0] sm:$0xff]
        %v301 = vld [vmem:[#allocation2 + $0xf8] sm:$0xff]
        %v302 = vld [vmem:[%s202] sm:$0xff]
        %v303 = vld [vmem:[%s202 + $0x8] sm:$0xff]
        %v304 = vld [vmem:[%s202 + $0x10] sm:$0xff]
        %v305 = vld [vmem:[%s202 + $0x18] sm:$0xff]
        %v306 = vld [vmem:[%s202 + $0x20] sm:$0xff]
        %v307 = vld [vmem:[%s202 + $0x28] sm:$0xff]
        %v308 = vld [vmem:[%s202 + $0x30] sm:$0xff]
        %v309 = vld [vmem:[%s202 + $0x38] sm:$0xff]
        %v310 = vld [vmem:[%s202 + $0x40] sm:$0xff]
        %v311 = vld [vmem:[%s202 + $0x48] sm:$0xff]
        %v312 = vld [vmem:[%s202 + $0x50] sm:$0xff]
        %v313 = vld [vmem:[%s202 + $0x58] sm:$0xff]
        %v314 = vld [vmem:[%s202 + $0x60] sm:$0xff]
        %v315 = vld [vmem:[%s202 + $0x68] sm:$0xff]
        %v316 = vld [vmem:[%s202 + $0x70] sm:$0xff]
        %v317 = vld [vmem:[%s202 + $0x78] sm:$0xff]
        %v318 = vld [vmem:[%s202 + $0x80] sm:$0xff]
        %v319 = vld [vmem:[%s202 + $0x88] sm:$0xff]
        %v320 = vld [vmem:[%s202 + $0x90] sm:$0xff]
        %v321 = vld [vmem:[%s202 + $0x98] sm:$0xff]
        %v322 = vld [vmem:[%s202 + $0xa0] sm:$0xff]
        %v323 = vld [vmem:[%s202 + $0xa8] sm:$0xff]
        %v324 = vld [vmem:[%s202 + $0xb0] sm:$0xff]
        %v325 = vld [vmem:[%s202 + $0xb8] sm:$0xff]
        %v326 = vld [vmem:[%s202 + $0xc0] sm:$0xff]
        %v327 = vld [vmem:[%s202 + $0xc8] sm:$0xff]
        %v328 = vld [vmem:[%s202 + $0xd0] sm:$0xff]
        %v329 = vld [vmem:[%s202 + $0xd8] sm:$0xff]
        %v330 = vld [vmem:[%s202 + $0xe0] sm:$0xff]
        %v331 = vld [vmem:[%s202 + $0xe8] sm:$0xff]
        %v332 = vld [vmem:[%s202 + $0xf0] sm:$0xff]
        %v333 = vld [vmem:[%s202 + $0xf8] sm:$0xff]
        %v334 = vld [vmem:[%s202 + $0x100] sm:$0xff]
        %v335 = vld [vmem:[%s202 + $0x108] sm:$0xff]
        %v336 = vld [vmem:[%s202 + $0x110] sm:$0xff]
        %v337 = vld [vmem:[%s202 + $0x118] sm:$0xff]
        %v338 = vld [vmem:[%s202 + $0x120] sm:$0xff]
        %v339 = vld [vmem:[%s202 + $0x128] sm:$0xff]
        %v340 = vld [vmem:[%s202 + $0x130] sm:$0xff]
        %v341 = vld [vmem:[%s202 + $0x138] sm:$0xff]
        %v342 = vld [vmem:[%s202 + $0x140] sm:$0xff]
        %v343 = vld [vmem:[%s202 + $0x148] sm:$0xff]
        %v344 = vld [vmem:[%s202 + $0x150] sm:$0xff]
        %v345 = vld [vmem:[%s202 + $0x158] sm:$0xff]
        %v346 = vld [vmem:[%s202 + $0x160] sm:$0xff]
        %v347 = vld [vmem:[%s202 + $0x168] sm:$0xff]
        %v348 = vld [vmem:[%s202 + $0x170] sm:$0xff]
        %v349 = vld [vmem:[%s202 + $0x178] sm:$0xff]
        %v350 = vld [vmem:[%s202 + $0x180] sm:$0xff]
        %v351 = vld [vmem:[%s202 + $0x188] sm:$0xff]
        %v352 = vld [vmem:[%s202 + $0x190] sm:$0xff]
        %v353 = vld [vmem:[%s202 + $0x198] sm:$0xff]
        %v354 = vld [vmem:[%s202 + $0x1a0] sm:$0xff]
        %v355 = vld [vmem:[%s202 + $0x1a8] sm:$0xff]
        %v356 = vld [vmem:[%s202 + $0x1b0] sm:$0xff]
        %v357 = vld [vmem:[%s202 + $0x1b8] sm:$0xff]
        %v358 = vld [vmem:[%s202 + $0x1c0] sm:$0xff]
        %v359 = vld [vmem:[%s202 + $0x1c8] sm:$0xff]
        %v360 = vld [vmem:[%s202 + $0x1d0] sm:$0xff]
        %v361 = vld [vmem:[%s202 + $0x1d8] sm:$0xff]
        %v362 = vld [vmem:[%s202 + $0x1e0] sm:$0xff]
        %v363 = vld [vmem:[%s202 + $0x1e8] sm:$0xff]
        %v364 = vld [vmem:[%s202 + $0x1f0] sm:$0xff]
        %v365 = vld [vmem:[%s202 + $0x1f8] sm:$0xff]
        %v366 = vld [vmem:[#allocation6] sm:$0xf]
        %v367 = vld [vmem:[#allocation6 + $0x4] sm:$0xf]
        %v368 = vld [vmem:[#allocation6 + $0x8] sm:$0xf]
        %v369 = vld [vmem:[#allocation6 + $0xc] sm:$0xf]
        %v370 = vld [vmem:[#allocation6 + $0x10] sm:$0xf]
        %v371 = vld [vmem:[#allocation6 + $0x14] sm:$0xf]
        %v372 = vld [vmem:[#allocation6 + $0x18] sm:$0xf]
        %v373 = vld [vmem:[#allocation6 + $0x1c] sm:$0xf]
        %v374 = vld [vmem:[#allocation6 + $0x20] sm:$0xf]
        %v375 = vld [vmem:[#allocation6 + $0x24] sm:$0xf]
        %v376 = vld [vmem:[#allocation6 + $0x28] sm:$0xf]
        %v377 = vld [vmem:[#allocation6 + $0x2c] sm:$0xf]
        %v378 = vld [vmem:[#allocation6 + $0x30] sm:$0xf]
        %v379 = vld [vmem:[#allocation6 + $0x34] sm:$0xf]
        %v380 = vld [vmem:[#allocation6 + $0x38] sm:$0xf]
        %v381 = vld [vmem:[#allocation6 + $0x3c] sm:$0xf]
        %v382 = vld [vmem:[#allocation6 + $0x40] sm:$0xf]
        %v383 = vld [vmem:[#allocation6 + $0x44] sm:$0xf]
        %v384 = vld [vmem:[#allocation6 + $0x48] sm:$0xf]
        %v385 = vld [vmem:[#allocation6 + $0x4c] sm:$0xf]
        %v386 = vld [vmem:[#allocation6 + $0x50] sm:$0xf]
        %v387 = vld [vmem:[#allocation6 + $0x54] sm:$0xf]
        %v388 = vld [vmem:[#allocation6 + $0x58] sm:$0xf]
        %v389 = vld [vmem:[#allocation6 + $0x5c] sm:$0xf]
        %v390 = vld [vmem:[#allocation6 + $0x60] sm:$0xf]
        %v391 = vld [vmem:[#allocation6 + $0x64] sm:$0xf]
        %v392 = vld [vmem:[#allocation6 + $0x68] sm:$0xf]
        %v393 = vld [vmem:[#allocation6 + $0x6c] sm:$0xf]
        %v394 = vld [vmem:[#allocation6 + $0x70] sm:$0xf]
        %v395 = vld [vmem:[#allocation6 + $0x74] sm:$0xf]
        %v396 = vld [vmem:[#allocation6 + $0x78] sm:$0xf]
        %v397 = vld [vmem:[#allocation6 + $0x7c] sm:$0xf]
        %v398 = vld [vmem:[#allocation6 + $0x80] sm:$0xf]
        %v399 = vld [vmem:[#allocation6 + $0x84] sm:$0xf]
        %v400 = vld [vmem:[#allocation6 + $0x88] sm:$0xf]
        %v401 = vld [vmem:[#allocation6 + $0x8c] sm:$0xf]
        %v402 = vld [vmem:[#allocation6 + $0x90] sm:$0xf]
        %v403 = vld [vmem:[#allocation6 + $0x94] sm:$0xf]
        %v404 = vld [vmem:[#allocation6 + $0x98] sm:$0xf]
        %v405 = vld [vmem:[#allocation6 + $0x9c] sm:$0xf]
        %v406 = vld [vmem:[#allocation6 + $0xa0] sm:$0xf]
        %v407 = vld [vmem:[#allocation6 + $0xa4] sm:$0xf]
        %v408 = vld [vmem:[#allocation6 + $0xa8] sm:$0xf]
        %v409 = vld [vmem:[#allocation6 + $0xac] sm:$0xf]
        %v410 = vld [vmem:[#allocation6 + $0xb0] sm:$0xf]
        %v411 = vld [vmem:[#allocation6 + $0xb4] sm:$0xf]
        %v412 = vld [vmem:[#allocation6 + $0xb8] sm:$0xf]
        %v413 = vld [vmem:[#allocation6 + $0xbc] sm:$0xf]
        %v414 = vld [vmem:[#allocation6 + $0xc0] sm:$0xf]
        %v415 = vld [vmem:[#allocation6 + $0xc4] sm:$0xf]
        %v416 = vld [vmem:[#allocation6 + $0xc8] sm:$0xf]
        %v417 = vld [vmem:[#allocation6 + $0xcc] sm:$0xf]
        %v418 = vld [vmem:[#allocation6 + $0xd0] sm:$0xf]
        %v419 = vld [vmem:[#allocation6 + $0xd4] sm:$0xf]
        %v420 = vld [vmem:[#allocation6 + $0xd8] sm:$0xf]
        %v421 = vld [vmem:[#allocation6 + $0xdc] sm:$0xf]
        %v422 = vld [vmem:[#allocation6 + $0xe0] sm:$0xf]
        %v423 = vld [vmem:[#allocation6 + $0xe4] sm:$0xf]
        %v424 = vld [vmem:[#allocation6 + $0xe8] sm:$0xf]
        %v425 = vld [vmem:[#allocation6 + $0xec] sm:$0xf]
        %v426 = vld [vmem:[#allocation6 + $0xf0] sm:$0xf]
        %v427 = vld [vmem:[#allocation6 + $0xf4] sm:$0xf]
        %v428 = vld [vmem:[#allocation6 + $0xf8] sm:$0xf]
        %v429 = vld [vmem:[#allocation6 + $0xfc] sm:$0xf]
        %v494 = vunpack.c.l.b16 %v302
        %v495 = vunpack.c.h.b16 %v302
        %v496 = vunpack.c.l.b16 %v303
        %v497 = vunpack.c.h.b16 %v303
        %v498 = vunpack.c.l.b16 %v304
        %v499 = vunpack.c.h.b16 %v304
        %v500 = vunpack.c.l.b16 %v305
        %v501 = vunpack.c.h.b16 %v305
        %v502 = vunpack.c.l.b16 %v306
        %v503 = vunpack.c.h.b16 %v306
        %v504 = vunpack.c.l.b16 %v307
        %v505 = vunpack.c.h.b16 %v307
        %v506 = vunpack.c.l.b16 %v308
        %v507 = vunpack.c.h.b16 %v308
        %v508 = vunpack.c.l.b16 %v309
        %v509 = vunpack.c.h.b16 %v309
        %v510 = vunpack.c.l.b16 %v310
        %v511 = vunpack.c.h.b16 %v310
        %v512 = vunpack.c.l.b16 %v311
        %v513 = vunpack.c.h.b16 %v311
        %v514 = vunpack.c.l.b16 %v312
        %v515 = vunpack.c.h.b16 %v312
        %v516 = vunpack.c.l.b16 %v313
        %v517 = vunpack.c.h.b16 %v313
        %v518 = vunpack.c.l.b16 %v314
        %v519 = vunpack.c.h.b16 %v314
        %v520 = vunpack.c.l.b16 %v315
        %v521 = vunpack.c.h.b16 %v315
        %v522 = vunpack.c.l.b16 %v316
        %v523 = vunpack.c.h.b16 %v316
        %v524 = vunpack.c.l.b16 %v317
        %v525 = vunpack.c.h.b16 %v317
        %v526 = vunpack.c.l.b16 %v318
        %v527 = vunpack.c.h.b16 %v318
        %v528 = vunpack.c.l.b16 %v319
        %v529 = vunpack.c.h.b16 %v319
        %v530 = vunpack.c.l.b16 %v320
        %v531 = vunpack.c.h.b16 %v320
        %v532 = vunpack.c.l.b16 %v321
        %v533 = vunpack.c.h.b16 %v321
        %v534 = vunpack.c.l.b16 %v322
        %v535 = vunpack.c.h.b16 %v322
        %v536 = vunpack.c.l.b16 %v323
        %v537 = vunpack.c.h.b16 %v323
        %v538 = vunpack.c.l.b16 %v324
        %v539 = vunpack.c.h.b16 %v324
        %v540 = vunpack.c.l.b16 %v325
        %v541 = vunpack.c.h.b16 %v325
        %v542 = vunpack.c.l.b16 %v326
        %v543 = vunpack.c.h.b16 %v326
        %v544 = vunpack.c.l.b16 %v327
        %v545 = vunpack.c.h.b16 %v327
        %v546 = vunpack.c.l.b16 %v328
        %v547 = vunpack.c.h.b16 %v328
        %v548 = vunpack.c.l.b16 %v329
        %v549 = vunpack.c.h.b16 %v329
        %v550 = vunpack.c.l.b16 %v330
        %v551 = vunpack.c.h.b16 %v330
        %v552 = vunpack.c.l.b16 %v331
        %v553 = vunpack.c.h.b16 %v331
        %v554 = vunpack.c.l.b16 %v332
        %v555 = vunpack.c.h.b16 %v332
        %v556 = vunpack.c.l.b16 %v333
        %v557 = vunpack.c.h.b16 %v333
        %v558 = vunpack.c.l.b16 %v334
        %v559 = vunpack.c.h.b16 %v334
        %v560 = vunpack.c.l.b16 %v335
        %v561 = vunpack.c.h.b16 %v335
        %v562 = vunpack.c.l.b16 %v336
        %v563 = vunpack.c.h.b16 %v336
        %v564 = vunpack.c.l.b16 %v337
        %v565 = vunpack.c.h.b16 %v337
        %v566 = vunpack.c.l.b16 %v338
        %v567 = vunpack.c.h.b16 %v338
        %v568 = vunpack.c.l.b16 %v339
        %v569 = vunpack.c.h.b16 %v339
        %v570 = vunpack.c.l.b16 %v340
        %v571 = vunpack.c.h.b16 %v340
        %v572 = vunpack.c.l.b16 %v341
        %v573 = vunpack.c.h.b16 %v341
        %v574 = vunpack.c.l.b16 %v342
        %v575 = vunpack.c.h.b16 %v342
        %v576 = vunpack.c.l.b16 %v343
        %v577 = vunpack.c.h.b16 %v343
        %v578 = vunpack.c.l.b16 %v344
        %v579 = vunpack.c.h.b16 %v344
        %v580 = vunpack.c.l.b16 %v345
        %v581 = vunpack.c.h.b16 %v345
        %v582 = vunpack.c.l.b16 %v346
        %v583 = vunpack.c.h.b16 %v346
        %v584 = vunpack.c.l.b16 %v347
        %v585 = vunpack.c.h.b16 %v347
        %v586 = vunpack.c.l.b16 %v348
        %v587 = vunpack.c.h.b16 %v348
        %v588 = vunpack.c.l.b16 %v349
        %v589 = vunpack.c.h.b16 %v349
        %v590 = vunpack.c.l.b16 %v350
        %v591 = vunpack.c.h.b16 %v350
        %v592 = vunpack.c.l.b16 %v351
        %v593 = vunpack.c.h.b16 %v351
        %v594 = vunpack.c.l.b16 %v352
        %v595 = vunpack.c.h.b16 %v352
        %v596 = vunpack.c.l.b16 %v353
        %v597 = vunpack.c.h.b16 %v353
        %v598 = vunpack.c.l.b16 %v354
        %v599 = vunpack.c.h.b16 %v354
        %v600 = vunpack.c.l.b16 %v355
        %v601 = vunpack.c.h.b16 %v355
        %v602 = vunpack.c.l.b16 %v356
        %v603 = vunpack.c.h.b16 %v356
        %v604 = vunpack.c.l.b16 %v357
        %v605 = vunpack.c.h.b16 %v357
        %v606 = vunpack.c.l.b16 %v358
        %v607 = vunpack.c.h.b16 %v358
        %v608 = vunpack.c.l.b16 %v359
        %v609 = vunpack.c.h.b16 %v359
        %v610 = vunpack.c.l.b16 %v360
        %v611 = vunpack.c.h.b16 %v360
        %v612 = vunpack.c.l.b16 %v361
        %v613 = vunpack.c.h.b16 %v361
        %v614 = vunpack.c.l.b16 %v362
        %v615 = vunpack.c.h.b16 %v362
        %v616 = vunpack.c.l.b16 %v363
        %v617 = vunpack.c.h.b16 %v363
        %v618 = vunpack.c.l.b16 %v364
        %v619 = vunpack.c.h.b16 %v364
        %v620 = vunpack.c.l.b16 %v365
        %v621 = vunpack.c.h.b16 %v365
        %v622 = vpack.c.b16 %v498, %v494
        %v623 = vpack.c.b16 %v499, %v495
        %v624 = vpack.c.b16 %v500, %v496
        %v625 = vpack.c.b16 %v501, %v497
        %v626 = vpack.c.b16 %v506, %v502
        %v627 = vpack.c.b16 %v507, %v503
        %v628 = vpack.c.b16 %v508, %v504
        %v629 = vpack.c.b16 %v509, %v505
        %v630 = vpack.c.b16 %v514, %v510
        %v631 = vpack.c.b16 %v515, %v511
        %v632 = vpack.c.b16 %v516, %v512
        %v633 = vpack.c.b16 %v517, %v513
        %v634 = vpack.c.b16 %v522, %v518
        %v635 = vpack.c.b16 %v523, %v519
        %v636 = vpack.c.b16 %v524, %v520
        %v637 = vpack.c.b16 %v525, %v521
        %v638 = vpack.c.b16 %v530, %v526
        %v639 = vpack.c.b16 %v531, %v527
        %v640 = vpack.c.b16 %v532, %v528
        %v641 = vpack.c.b16 %v533, %v529
        %v642 = vpack.c.b16 %v538, %v534
        %v643 = vpack.c.b16 %v539, %v535
        %v644 = vpack.c.b16 %v540, %v536
        %v645 = vpack.c.b16 %v541, %v537
        %v646 = vpack.c.b16 %v546, %v542
        %v647 = vpack.c.b16 %v547, %v543
        %v648 = vpack.c.b16 %v548, %v544
        %v649 = vpack.c.b16 %v549, %v545
        %v650 = vpack.c.b16 %v554, %v550
        %v651 = vpack.c.b16 %v555, %v551
        %v652 = vpack.c.b16 %v556, %v552
        %v653 = vpack.c.b16 %v557, %v553
        %v654 = vpack.c.b16 %v562, %v558
        %v655 = vpack.c.b16 %v563, %v559
        %v656 = vpack.c.b16 %v564, %v560
        %v657 = vpack.c.b16 %v565, %v561
        %v658 = vpack.c.b16 %v570, %v566
        %v659 = vpack.c.b16 %v571, %v567
        %v660 = vpack.c.b16 %v572, %v568
        %v661 = vpack.c.b16 %v573, %v569
        %v662 = vpack.c.b16 %v578, %v574
        %v663 = vpack.c.b16 %v579, %v575
        %v664 = vpack.c.b16 %v580, %v576
        %v665 = vpack.c.b16 %v581, %v577
        %v666 = vpack.c.b16 %v586, %v582
        %v667 = vpack.c.b16 %v587, %v583
        %v668 = vpack.c.b16 %v588, %v584
        %v669 = vpack.c.b16 %v589, %v585
        %v670 = vpack.c.b16 %v594, %v590
        %v671 = vpack.c.b16 %v595, %v591
        %v672 = vpack.c.b16 %v596, %v592
        %v673 = vpack.c.b16 %v597, %v593
        %v674 = vpack.c.b16 %v602, %v598
        %v675 = vpack.c.b16 %v603, %v599
        %v676 = vpack.c.b16 %v604, %v600
        %v677 = vpack.c.b16 %v605, %v601
        %v678 = vpack.c.b16 %v610, %v606
        %v679 = vpack.c.b16 %v611, %v607
        %v680 = vpack.c.b16 %v612, %v608
        %v681 = vpack.c.b16 %v613, %v609
        %v682 = vpack.c.b16 %v618, %v614
        %v683 = vpack.c.b16 %v619, %v615
        %v684 = vpack.c.b16 %v620, %v616
        %v685 = vpack.c.b16 %v621, %v617
        %v814 = vunpack.c.l.b16 %v366
        %v815 = vunpack.c.l.b16 %v367
        %v816 = vunpack.c.l.b16 %v368
        %v817 = vunpack.c.l.b16 %v369
        %v818 = vunpack.c.l.b16 %v370
        %v819 = vunpack.c.l.b16 %v371
        %v820 = vunpack.c.l.b16 %v372
        %v821 = vunpack.c.l.b16 %v373
        %v822 = vunpack.c.l.b16 %v374
        %v823 = vunpack.c.l.b16 %v375
        %v824 = vunpack.c.l.b16 %v376
        %v825 = vunpack.c.l.b16 %v377
        %v826 = vunpack.c.l.b16 %v378
        %v827 = vunpack.c.l.b16 %v379
        %v828 = vunpack.c.l.b16 %v380
        %v829 = vunpack.c.l.b16 %v381
        %v830 = vunpack.c.l.b16 %v382
        %v831 = vunpack.c.l.b16 %v383
        %v832 = vunpack.c.l.b16 %v384
        %v833 = vunpack.c.l.b16 %v385
        %v834 = vunpack.c.l.b16 %v386
        %v835 = vunpack.c.l.b16 %v387
        %v836 = vunpack.c.l.b16 %v388
        %v837 = vunpack.c.l.b16 %v389
        %v838 = vunpack.c.l.b16 %v390
        %v839 = vunpack.c.l.b16 %v391
        %v840 = vunpack.c.l.b16 %v392
        %v841 = vunpack.c.l.b16 %v393
        %v842 = vunpack.c.l.b16 %v394
        %v843 = vunpack.c.l.b16 %v395
        %v844 = vunpack.c.l.b16 %v396
        %v845 = vunpack.c.l.b16 %v397
        %v846 = vunpack.c.l.b16 %v398
        %v847 = vunpack.c.l.b16 %v399
        %v848 = vunpack.c.l.b16 %v400
        %v849 = vunpack.c.l.b16 %v401
        %v850 = vunpack.c.l.b16 %v402
        %v851 = vunpack.c.l.b16 %v403
        %v852 = vunpack.c.l.b16 %v404
        %v853 = vunpack.c.l.b16 %v405
        %v854 = vunpack.c.l.b16 %v406
        %v855 = vunpack.c.l.b16 %v407
        %v856 = vunpack.c.l.b16 %v408
        %v857 = vunpack.c.l.b16 %v409
        %v858 = vunpack.c.l.b16 %v410
        %v859 = vunpack.c.l.b16 %v411
        %v860 = vunpack.c.l.b16 %v412
        %v861 = vunpack.c.l.b16 %v413
        %v862 = vunpack.c.l.b16 %v414
        %v863 = vunpack.c.l.b16 %v415
        %v864 = vunpack.c.l.b16 %v416
        %v865 = vunpack.c.l.b16 %v417
        %v866 = vunpack.c.l.b16 %v418
        %v867 = vunpack.c.l.b16 %v419
        %v868 = vunpack.c.l.b16 %v420
        %v869 = vunpack.c.l.b16 %v421
        %v870 = vunpack.c.l.b16 %v422
        %v871 = vunpack.c.l.b16 %v423
        %v872 = vunpack.c.l.b16 %v424
        %v873 = vunpack.c.l.b16 %v425
        %v874 = vunpack.c.l.b16 %v426
        %v875 = vunpack.c.l.b16 %v427
        %v876 = vunpack.c.l.b16 %v428
        %v877 = vunpack.c.l.b16 %v429
        %v878 = vpack.c.b16 %v815, %v814
        %v879 = vpack.c.b16 %v817, %v816
        %v880 = vpack.c.b16 %v819, %v818
        %v881 = vpack.c.b16 %v821, %v820
        %v882 = vpack.c.b16 %v823, %v822
        %v883 = vpack.c.b16 %v825, %v824
        %v884 = vpack.c.b16 %v827, %v826
        %v885 = vpack.c.b16 %v829, %v828
        %v886 = vpack.c.b16 %v831, %v830
        %v887 = vpack.c.b16 %v833, %v832
        %v888 = vpack.c.b16 %v835, %v834
        %v889 = vpack.c.b16 %v837, %v836
        %v890 = vpack.c.b16 %v839, %v838
        %v891 = vpack.c.b16 %v841, %v840
        %v892 = vpack.c.b16 %v843, %v842
        %v893 = vpack.c.b16 %v845, %v844
        %v894 = vpack.c.b16 %v847, %v846
        %v895 = vpack.c.b16 %v849, %v848
        %v896 = vpack.c.b16 %v851, %v850
        %v897 = vpack.c.b16 %v853, %v852
        %v898 = vpack.c.b16 %v855, %v854
        %v899 = vpack.c.b16 %v857, %v856
        %v900 = vpack.c.b16 %v859, %v858
        %v901 = vpack.c.b16 %v861, %v860
        %v902 = vpack.c.b16 %v863, %v862
        %v903 = vpack.c.b16 %v865, %v864
        %v904 = vpack.c.b16 %v867, %v866
        %v905 = vpack.c.b16 %v869, %v868
        %v906 = vpack.c.b16 %v871, %v870
        %v907 = vpack.c.b16 %v873, %v872
        %v908 = vpack.c.b16 %v875, %v874
        %v909 = vpack.c.b16 %v877, %v876
        %942 = vmatprep.subr.bf16.mxu0 0
        %943 = vmatpush1.bf16.msra.mxu0 %v885
        %944 = vmatprep.subr.bf16.mxu0 0
        %945 = vmatpush1.bf16.msra.mxu0 %v884
        %946 = vmatprep.subr.bf16.mxu0 0
        %947 = vmatpush1.bf16.msra.mxu0 %v883
        %948 = vmatprep.subr.bf16.mxu0 0
        %949 = vmatpush1.bf16.msra.mxu0 %v882
        %950 = vmatprep.subr.bf16.mxu0 0
        %951 = vmatpush1.bf16.msra.mxu0 %v881
        %952 = vmatprep.subr.bf16.mxu0 0
        %953 = vmatpush1.bf16.msra.mxu0 %v880
        %954 = vmatprep.subr.bf16.mxu0 0
        %955 = vmatpush1.bf16.msra.mxu0 %v879
        %956 = vmatprep.subr.bf16.mxu0 0
        %957 = vmatpush1.bf16.msra.mxu0 %v878
        %958 = vmatprep.subr.bf16.mxu0 0
        %959 = vmatpush2.bf16.msra.mxu0 %v893
        %960 = vmatprep.subr.bf16.mxu0 0
        %961 = vmatpush2.bf16.msra.mxu0 %v892
        %962 = vmatprep.subr.bf16.mxu0 0
        %963 = vmatpush2.bf16.msra.mxu0 %v891
        %964 = vmatprep.subr.bf16.mxu0 0
        %965 = vmatpush2.bf16.msra.mxu0 %v890
        %966 = vmatprep.subr.bf16.mxu0 0
        %967 = vmatpush2.bf16.msra.mxu0 %v889
        %968 = vmatprep.subr.bf16.mxu0 0
        %969 = vmatpush2.bf16.msra.mxu0 %v888
        %970 = vmatprep.subr.bf16.mxu0 0
        %971 = vmatpush2.bf16.msra.mxu0 %v887
        %972 = vmatprep.subr.bf16.mxu0 0
        %973 = vmatpush2.bf16.msra.mxu0 %v886
        %974 = vmatprep.mubr.bf16.mxu0 %v623
        %975 = vmatmul.mubr.bf16.gmra.mxu0 %v622
        %v976 = vpop.f32.mrf.mxu0
        %v977 = vadd.f32 0.0, %v976
        %v978 = vpop.f32.mrf.mxu0
        %v979 = vpop.f32.mrf.mxu0
        %v980 = vadd.f32 0.0, %v979
        %v981 = vpop.f32.mrf.mxu0
        %982 = vmatprep.mubr.bf16.mxu0 %v627
        %983 = vmatmul.mubr.bf16.gmra.mxu0 %v626
        %v984 = vpop.f32.mrf.mxu0
        %v985 = vadd.f32 0.0, %v984
        %v986 = vpop.f32.mrf.mxu0
        %v987 = vpop.f32.mrf.mxu0
        %v988 = vadd.f32 0.0, %v987
        %v989 = vpop.f32.mrf.mxu0
        %990 = vmatprep.mubr.bf16.mxu0 %v631
        %991 = vmatmul.mubr.bf16.gmra.mxu0 %v630
        %v992 = vpop.f32.mrf.mxu0
        %v993 = vadd.f32 0.0, %v992
        %v994 = vpop.f32.mrf.mxu0
        %v995 = vpop.f32.mrf.mxu0
        %v996 = vadd.f32 0.0, %v995
        %v997 = vpop.f32.mrf.mxu0
        %998 = vmatprep.mubr.bf16.mxu0 %v635
        %999 = vmatmul.mubr.bf16.gmra.mxu0 %v634
        %v1000 = vpop.f32.mrf.mxu0
        %v1001 = vadd.f32 0.0, %v1000
        %v1002 = vpop.f32.mrf.mxu0
        %v1003 = vpop.f32.mrf.mxu0
        %v1004 = vadd.f32 0.0, %v1003
        %v1005 = vpop.f32.mrf.mxu0
        %1006 = vmatprep.mubr.bf16.mxu0 %v639
        %1007 = vmatmul.mubr.bf16.gmra.mxu0 %v638
        %v1008 = vpop.f32.mrf.mxu0
        %v1009 = vadd.f32 0.0, %v1008
        %v1010 = vpop.f32.mrf.mxu0
        %v1011 = vpop.f32.mrf.mxu0
        %v1012 = vadd.f32 0.0, %v1011
        %v1013 = vpop.f32.mrf.mxu0
        %1014 = vmatprep.mubr.bf16.mxu0 %v643
        %1015 = vmatmul.mubr.bf16.gmra.mxu0 %v642
        %v1016 = vpop.f32.mrf.mxu0
        %v1017 = vadd.f32 0.0, %v1016
        %v1018 = vpop.f32.mrf.mxu0
        %v1019 = vpop.f32.mrf.mxu0
        %v1020 = vadd.f32 0.0, %v1019
        %v1021 = vpop.f32.mrf.mxu0
        %1022 = vmatprep.mubr.bf16.mxu0 %v647
        %1023 = vmatmul.mubr.bf16.gmra.mxu0 %v646
        %v1024 = vpop.f32.mrf.mxu0
        %v1025 = vadd.f32 0.0, %v1024
        %v1026 = vpop.f32.mrf.mxu0
        %v1027 = vpop.f32.mrf.mxu0
        %v1028 = vadd.f32 0.0, %v1027
        %v1029 = vpop.f32.mrf.mxu0
        %1030 = vmatprep.mubr.bf16.mxu0 %v651
        %1031 = vmatmul.mubr.bf16.gmra.mxu0 %v650
        %v1032 = vpop.f32.mrf.mxu0
        %v1033 = vadd.f32 0.0, %v1032
        %v1034 = vpop.f32.mrf.mxu0
        %v1035 = vpop.f32.mrf.mxu0
        %v1036 = vadd.f32 0.0, %v1035
        %v1037 = vpop.f32.mrf.mxu0
        %1038 = vmatprep.mubr.bf16.mxu0 %v655
        %1039 = vmatmul.mubr.bf16.gmra.mxu0 %v654
        %v1040 = vpop.f32.mrf.mxu0
        %v1041 = vadd.f32 0.0, %v1040
        %v1042 = vpop.f32.mrf.mxu0
        %v1043 = vpop.f32.mrf.mxu0
        %v1044 = vadd.f32 0.0, %v1043
        %v1045 = vpop.f32.mrf.mxu0
        %1046 = vmatprep.mubr.bf16.mxu0 %v659
        %1047 = vmatmul.mubr.bf16.gmra.mxu0 %v658
        %v1048 = vpop.f32.mrf.mxu0
        %v1049 = vadd.f32 0.0, %v1048
        %v1050 = vpop.f32.mrf.mxu0
        %v1051 = vpop.f32.mrf.mxu0
        %v1052 = vadd.f32 0.0, %v1051
        %v1053 = vpop.f32.mrf.mxu0
        %1054 = vmatprep.mubr.bf16.mxu0 %v663
        %1055 = vmatmul.mubr.bf16.gmra.mxu0 %v662
        %v1056 = vpop.f32.mrf.mxu0
        %v1057 = vadd.f32 0.0, %v1056
        %v1058 = vpop.f32.mrf.mxu0
        %v1059 = vpop.f32.mrf.mxu0
        %v1060 = vadd.f32 0.0, %v1059
        %v1061 = vpop.f32.mrf.mxu0
        %1062 = vmatprep.mubr.bf16.mxu0 %v667
        %1063 = vmatmul.mubr.bf16.gmra.mxu0 %v666
        %v1064 = vpop.f32.mrf.mxu0
        %v1065 = vadd.f32 0.0, %v1064
        %v1066 = vpop.f32.mrf.mxu0
        %v1067 = vpop.f32.mrf.mxu0
        %v1068 = vadd.f32 0.0, %v1067
        %v1069 = vpop.f32.mrf.mxu0
        %1070 = vmatprep.mubr.bf16.mxu0 %v671
        %1071 = vmatmul.mubr.bf16.gmra.mxu0 %v670
        %v1072 = vpop.f32.mrf.mxu0
        %v1073 = vadd.f32 0.0, %v1072
        %v1074 = vpop.f32.mrf.mxu0
        %v1075 = vpop.f32.mrf.mxu0
        %v1076 = vadd.f32 0.0, %v1075
        %v1077 = vpop.f32.mrf.mxu0
        %1078 = vmatprep.mubr.bf16.mxu0 %v675
        %1079 = vmatmul.mubr.bf16.gmra.mxu0 %v674
        %v1080 = vpop.f32.mrf.mxu0
        %v1081 = vadd.f32 0.0, %v1080
        %v1082 = vpop.f32.mrf.mxu0
        %v1083 = vpop.f32.mrf.mxu0
        %v1084 = vadd.f32 0.0, %v1083
        %v1085 = vpop.f32.mrf.mxu0
        %1086 = vmatprep.mubr.bf16.mxu0 %v679
        %1087 = vmatmul.mubr.bf16.gmra.mxu0 %v678
        %v1088 = vpop.f32.mrf.mxu0
        %v1089 = vadd.f32 0.0, %v1088
        %v1090 = vpop.f32.mrf.mxu0
        %v1091 = vpop.f32.mrf.mxu0
        %v1092 = vadd.f32 0.0, %v1091
        %v1093 = vpop.f32.mrf.mxu0
        %1094 = vmatprep.mubr.bf16.mxu0 %v683
        %1095 = vmatmul.mubr.bf16.gmra.mxu0 %v682
        %v1096 = vpop.f32.mrf.mxu0
        %v1097 = vadd.f32 0.0, %v1096
        %v1098 = vpop.f32.mrf.mxu0
        %v1099 = vpop.f32.mrf.mxu0
        %v1100 = vadd.f32 0.0, %v1099
        %v1101 = vpop.f32.mrf.mxu0
        %1102 = vdwg.mxu0
        %1103 = vmatprep.subr.bf16.mxu0 0
        %1104 = vmatpush1.bf16.msra.mxu0 %v901
        %1105 = vmatprep.subr.bf16.mxu0 0
        %1106 = vmatpush1.bf16.msra.mxu0 %v900
        %1107 = vmatprep.subr.bf16.mxu0 0
        %1108 = vmatpush1.bf16.msra.mxu0 %v899
        %1109 = vmatprep.subr.bf16.mxu0 0
        %1110 = vmatpush1.bf16.msra.mxu0 %v898
        %1111 = vmatprep.subr.bf16.mxu0 0
        %1112 = vmatpush1.bf16.msra.mxu0 %v897
        %1113 = vmatprep.subr.bf16.mxu0 0
        %1114 = vmatpush1.bf16.msra.mxu0 %v896
        %1115 = vmatprep.subr.bf16.mxu0 0
        %1116 = vmatpush1.bf16.msra.mxu0 %v895
        %1117 = vmatprep.subr.bf16.mxu0 0
        %1118 = vmatpush1.bf16.msra.mxu0 %v894
        %1119 = vmatprep.subr.bf16.mxu0 0
        %1120 = vmatpush2.bf16.msra.mxu0 %v909
        %1121 = vmatprep.subr.bf16.mxu0 0
        %1122 = vmatpush2.bf16.msra.mxu0 %v908
        %1123 = vmatprep.subr.bf16.mxu0 0
        %1124 = vmatpush2.bf16.msra.mxu0 %v907
        %1125 = vmatprep.subr.bf16.mxu0 0
        %1126 = vmatpush2.bf16.msra.mxu0 %v906
        %1127 = vmatprep.subr.bf16.mxu0 0
        %1128 = vmatpush2.bf16.msra.mxu0 %v905
        %1129 = vmatprep.subr.bf16.mxu0 0
        %1130 = vmatpush2.bf16.msra.mxu0 %v904
        %1131 = vmatprep.subr.bf16.mxu0 0
        %1132 = vmatpush2.bf16.msra.mxu0 %v903
        %1133 = vmatprep.subr.bf16.mxu0 0
        %1134 = vmatpush2.bf16.msra.mxu0 %v902
        %1135 = vmatprep.mubr.bf16.mxu0 %v625
        %1136 = vmatmul.mubr.bf16.gmra.mxu0 %v624
        %v1137 = vpop.f32.mrf.mxu0
        %v1138 = vadd.f32 %v977, %v1137
        %v1139 = vpop.f32.mrf.mxu0
        %v1140 = vpop.f32.mrf.mxu0
        %v1141 = vadd.f32 %v980, %v1140
        %v1142 = vpop.f32.mrf.mxu0
        %1143 = vmatprep.mubr.bf16.mxu0 %v629
        %1144 = vmatmul.mubr.bf16.gmra.mxu0 %v628
        %v1145 = vpop.f32.mrf.mxu0
        %v1146 = vadd.f32 %v985, %v1145
        %v1147 = vpop.f32.mrf.mxu0
        %v1148 = vpop.f32.mrf.mxu0
        %v1149 = vadd.f32 %v988, %v1148
        %v1150 = vpop.f32.mrf.mxu0
        %1151 = vmatprep.mubr.bf16.mxu0 %v633
        %1152 = vmatmul.mubr.bf16.gmra.mxu0 %v632
        %v1153 = vpop.f32.mrf.mxu0
        %v1154 = vadd.f32 %v993, %v1153
        %v1155 = vpop.f32.mrf.mxu0
        %v1156 = vpop.f32.mrf.mxu0
        %v1157 = vadd.f32 %v996, %v1156
        %v1158 = vpop.f32.mrf.mxu0
        %1159 = vmatprep.mubr.bf16.mxu0 %v637
        %1160 = vmatmul.mubr.bf16.gmra.mxu0 %v636
        %v1161 = vpop.f32.mrf.mxu0
        %v1162 = vadd.f32 %v1001, %v1161
        %v1163 = vpop.f32.mrf.mxu0
        %v1164 = vpop.f32.mrf.mxu0
        %v1165 = vadd.f32 %v1004, %v1164
        %v1166 = vpop.f32.mrf.mxu0
        %1167 = vmatprep.mubr.bf16.mxu0 %v641
        %1168 = vmatmul.mubr.bf16.gmra.mxu0 %v640
        %v1169 = vpop.f32.mrf.mxu0
        %v1170 = vadd.f32 %v1009, %v1169
        %v1171 = vpop.f32.mrf.mxu0
        %v1172 = vpop.f32.mrf.mxu0
        %v1173 = vadd.f32 %v1012, %v1172
        %v1174 = vpop.f32.mrf.mxu0
        %1175 = vmatprep.mubr.bf16.mxu0 %v645
        %1176 = vmatmul.mubr.bf16.gmra.mxu0 %v644
        %v1177 = vpop.f32.mrf.mxu0
        %v1178 = vadd.f32 %v1017, %v1177
        %v1179 = vpop.f32.mrf.mxu0
        %v1180 = vpop.f32.mrf.mxu0
        %v1181 = vadd.f32 %v1020, %v1180
        %v1182 = vpop.f32.mrf.mxu0
        %1183 = vmatprep.mubr.bf16.mxu0 %v649
        %1184 = vmatmul.mubr.bf16.gmra.mxu0 %v648
        %v1185 = vpop.f32.mrf.mxu0
        %v1186 = vadd.f32 %v1025, %v1185
        %v1187 = vpop.f32.mrf.mxu0
        %v1188 = vpop.f32.mrf.mxu0
        %v1189 = vadd.f32 %v1028, %v1188
        %v1190 = vpop.f32.mrf.mxu0
        %1191 = vmatprep.mubr.bf16.mxu0 %v653
        %1192 = vmatmul.mubr.bf16.gmra.mxu0 %v652
        %v1193 = vpop.f32.mrf.mxu0
        %v1194 = vadd.f32 %v1033, %v1193
        %v1195 = vpop.f32.mrf.mxu0
        %v1196 = vpop.f32.mrf.mxu0
        %v1197 = vadd.f32 %v1036, %v1196
        %v1198 = vpop.f32.mrf.mxu0
        %1199 = vmatprep.mubr.bf16.mxu0 %v657
        %1200 = vmatmul.mubr.bf16.gmra.mxu0 %v656
        %v1201 = vpop.f32.mrf.mxu0
        %v1202 = vadd.f32 %v1041, %v1201
        %v1203 = vpop.f32.mrf.mxu0
        %v1204 = vpop.f32.mrf.mxu0
        %v1205 = vadd.f32 %v1044, %v1204
        %v1206 = vpop.f32.mrf.mxu0
        %1207 = vmatprep.mubr.bf16.mxu0 %v661
        %1208 = vmatmul.mubr.bf16.gmra.mxu0 %v660
        %v1209 = vpop.f32.mrf.mxu0
        %v1210 = vadd.f32 %v1049, %v1209
        %v1211 = vpop.f32.mrf.mxu0
        %v1212 = vpop.f32.mrf.mxu0
        %v1213 = vadd.f32 %v1052, %v1212
        %v1214 = vpop.f32.mrf.mxu0
        %1215 = vmatprep.mubr.bf16.mxu0 %v665
        %1216 = vmatmul.mubr.bf16.gmra.mxu0 %v664
        %v1217 = vpop.f32.mrf.mxu0
        %v1218 = vadd.f32 %v1057, %v1217
        %v1219 = vpop.f32.mrf.mxu0
        %v1220 = vpop.f32.mrf.mxu0
        %v1221 = vadd.f32 %v1060, %v1220
        %v1222 = vpop.f32.mrf.mxu0
        %1223 = vmatprep.mubr.bf16.mxu0 %v669
        %1224 = vmatmul.mubr.bf16.gmra.mxu0 %v668
        %v1225 = vpop.f32.mrf.mxu0
        %v1226 = vadd.f32 %v1065, %v1225
        %v1227 = vpop.f32.mrf.mxu0
        %v1228 = vpop.f32.mrf.mxu0
        %v1229 = vadd.f32 %v1068, %v1228
        %v1230 = vpop.f32.mrf.mxu0
        %1231 = vmatprep.mubr.bf16.mxu0 %v673
        %1232 = vmatmul.mubr.bf16.gmra.mxu0 %v672
        %v1233 = vpop.f32.mrf.mxu0
        %v1234 = vadd.f32 %v1073, %v1233
        %v1235 = vpop.f32.mrf.mxu0
        %v1236 = vpop.f32.mrf.mxu0
        %v1237 = vadd.f32 %v1076, %v1236
        %v1238 = vpop.f32.mrf.mxu0
        %1239 = vmatprep.mubr.bf16.mxu0 %v677
        %1240 = vmatmul.mubr.bf16.gmra.mxu0 %v676
        %v1241 = vpop.f32.mrf.mxu0
        %v1242 = vadd.f32 %v1081, %v1241
        %v1243 = vpop.f32.mrf.mxu0
        %v1244 = vpop.f32.mrf.mxu0
        %v1245 = vadd.f32 %v1084, %v1244
        %v1246 = vpop.f32.mrf.mxu0
        %1247 = vmatprep.mubr.bf16.mxu0 %v681
        %1248 = vmatmul.mubr.bf16.gmra.mxu0 %v680
        %v1249 = vpop.f32.mrf.mxu0
        %v1250 = vadd.f32 %v1089, %v1249
        %v1251 = vpop.f32.mrf.mxu0
        %v1252 = vpop.f32.mrf.mxu0
        %v1253 = vadd.f32 %v1092, %v1252
        %v1254 = vpop.f32.mrf.mxu0
        %1255 = vmatprep.mubr.bf16.mxu0 %v685
        %1256 = vmatmul.mubr.bf16.gmra.mxu0 %v684
        %v1257 = vpop.f32.mrf.mxu0
        %v1258 = vadd.f32 %v1097, %v1257
        %v1259 = vpop.f32.mrf.mxu0
        %v1260 = vpop.f32.mrf.mxu0
        %v1261 = vadd.f32 %v1100, %v1260
        %v1262 = vpop.f32.mrf.mxu0
        %1263 = vdwg.mxu0
        %v1264 = vadd.f32 %v270, %v1138
        %v1265 = vadd.f32 %v271, %v1141
        %v1266 = vadd.f32 %v272, %v1146
        %v1267 = vadd.f32 %v273, %v1149
        %v1268 = vadd.f32 %v274, %v1154
        %v1269 = vadd.f32 %v275, %v1157
        %v1270 = vadd.f32 %v276, %v1162
        %v1271 = vadd.f32 %v277, %v1165
        %v1272 = vadd.f32 %v278, %v1170
        %v1273 = vadd.f32 %v279, %v1173
        %v1274 = vadd.f32 %v280, %v1178
        %v1275 = vadd.f32 %v281, %v1181
        %v1276 = vadd.f32 %v282, %v1186
        %v1277 = vadd.f32 %v283, %v1189
        %v1278 = vadd.f32 %v284, %v1194
        %v1279 = vadd.f32 %v285, %v1197
        %v1280 = vadd.f32 %v286, %v1202
        %v1281 = vadd.f32 %v287, %v1205
        %v1282 = vadd.f32 %v288, %v1210
        %v1283 = vadd.f32 %v289, %v1213
        %v1284 = vadd.f32 %v290, %v1218
        %v1285 = vadd.f32 %v291, %v1221
        %v1286 = vadd.f32 %v292, %v1226
        %v1287 = vadd.f32 %v293, %v1229
        %v1288 = vadd.f32 %v294, %v1234
        %v1289 = vadd.f32 %v295, %v1237
        %v1290 = vadd.f32 %v296, %v1242
        %v1291 = vadd.f32 %v297, %v1245
        %v1292 = vadd.f32 %v298, %v1250
        %v1293 = vadd.f32 %v299, %v1253
        %v1294 = vadd.f32 %v300, %v1258
        %v1295 = vadd.f32 %v301, %v1261
        %1296 = vst [vmem:[#allocation2] sm:$0xff] %v1264
        %1297 = vst [vmem:[#allocation2 + $0x8] sm:$0xff] %v1265
        %1298 = vst [vmem:[#allocation2 + $0x10] sm:$0xff] %v1266
        %1299 = vst [vmem:[#allocation2 + $0x18] sm:$0xff] %v1267
        %1300 = vst [vmem:[#allocation2 + $0x20] sm:$0xff] %v1268
        %1301 = vst [vmem:[#allocation2 + $0x28] sm:$0xff] %v1269
        %1302 = vst [vmem:[#allocation2 + $0x30] sm:$0xff] %v1270
        %1303 = vst [vmem:[#allocation2 + $0x38] sm:$0xff] %v1271
        %1304 = vst [vmem:[#allocation2 + $0x40] sm:$0xff] %v1272
        %1305 = vst [vmem:[#allocation2 + $0x48] sm:$0xff] %v1273
        %1306 = vst [vmem:[#allocation2 + $0x50] sm:$0xff] %v1274
        %1307 = vst [vmem:[#allocation2 + $0x58] sm:$0xff] %v1275
        %1308 = vst [vmem:[#allocation2 + $0x60] sm:$0xff] %v1276
        %1309 = vst [vmem:[#allocation2 + $0x68] sm:$0xff] %v1277
        %1310 = vst [vmem:[#allocation2 + $0x70] sm:$0xff] %v1278
        %1311 = vst [vmem:[#allocation2 + $0x78] sm:$0xff] %v1279
        %1312 = vst [vmem:[#allocation2 + $0x80] sm:$0xff] %v1280
        %1313 = vst [vmem:[#allocation2 + $0x88] sm:$0xff] %v1281
        %1314 = vst [vmem:[#allocation2 + $0x90] sm:$0xff] %v1282
        %1315 = vst [vmem:[#allocation2 + $0x98] sm:$0xff] %v1283
        %1316 = vst [vmem:[#allocation2 + $0xa0] sm:$0xff] %v1284
        %1317 = vst [vmem:[#allocation2 + $0xa8] sm:$0xff] %v1285
        %1318 = vst [vmem:[#allocation2 + $0xb0] sm:$0xff] %v1286
        %1319 = vst [vmem:[#allocation2 + $0xb8] sm:$0xff] %v1287
        %1320 = vst [vmem:[#allocation2 + $0xc0] sm:$0xff] %v1288
        %1321 = vst [vmem:[#allocation2 + $0xc8] sm:$0xff] %v1289
        %1322 = vst [vmem:[#allocation2 + $0xd0] sm:$0xff] %v1290
        %1323 = vst [vmem:[#allocation2 + $0xd8] sm:$0xff] %v1291
        %1324 = vst [vmem:[#allocation2 + $0xe0] sm:$0xff] %v1292
        %1325 = vst [vmem:[#allocation2 + $0xe8] sm:$0xff] %v1293
        %1326 = vst [vmem:[#allocation2 + $0xf0] sm:$0xff] %v1294
        %1327 = vst [vmem:[#allocation2 + $0xf8] sm:$0xff] %v1295
        // Predicated region
        $region45: #{tpu_custom_call.1} parent=31 // pred_check
          %p1328 = pneg %p234
        $region46: #{tpu_custom_call.1} parent=31 // pred_check_branch
          %1330 = sbr.rel (%p1328) target = $region48
        $region47: #{tpu_custom_call.1} parent=31 // pred_region
          %v1331 = vld [vmem:[#allocation2] sm:$0xff]
          %v1332 = vld [vmem:[#allocation2 + $0x8] sm:$0xff]
          %v1333 = vld [vmem:[#allocation2 + $0x10] sm:$0xff]
          %v1334 = vld [vmem:[#allocation2 + $0x18] sm:$0xff]
          %v1335 = vld [vmem:[#allocation2 + $0x20] sm:$0xff]
          %v1336 = vld [vmem:[#allocation2 + $0x28] sm:$0xff]
          %v1337 = vld [vmem:[#allocation2 + $0x30] sm:$0xff]
          %v1338 = vld [vmem:[#allocation2 + $0x38] sm:$0xff]
          %v1339 = vld [vmem:[#allocation2 + $0x40] sm:$0xff]
          %v1340 = vld [vmem:[#allocation2 + $0x48] sm:$0xff]
          %v1341 = vld [vmem:[#allocation2 + $0x50] sm:$0xff]
          %v1342 = vld [vmem:[#allocation2 + $0x58] sm:$0xff]
          %v1343 = vld [vmem:[#allocation2 + $0x60] sm:$0xff]
          %v1344 = vld [vmem:[#allocation2 + $0x68] sm:$0xff]
          %v1345 = vld [vmem:[#allocation2 + $0x70] sm:$0xff]
          %v1346 = vld [vmem:[#allocation2 + $0x78] sm:$0xff]
          %v1347 = vld [vmem:[#allocation2 + $0x80] sm:$0xff]
          %v1348 = vld [vmem:[#allocation2 + $0x88] sm:$0xff]
          %v1349 = vld [vmem:[#allocation2 + $0x90] sm:$0xff]
          %v1350 = vld [vmem:[#allocation2 + $0x98] sm:$0xff]
          %v1351 = vld [vmem:[#allocation2 + $0xa0] sm:$0xff]
          %v1352 = vld [vmem:[#allocation2 + $0xa8] sm:$0xff]
          %v1353 = vld [vmem:[#allocation2 + $0xb0] sm:$0xff]
          %v1354 = vld [vmem:[#allocation2 + $0xb8] sm:$0xff]
          %v1355 = vld [vmem:[#allocation2 + $0xc0] sm:$0xff]
          %v1356 = vld [vmem:[#allocation2 + $0xc8] sm:$0xff]
          %v1357 = vld [vmem:[#allocation2 + $0xd0] sm:$0xff]
          %v1358 = vld [vmem:[#allocation2 + $0xd8] sm:$0xff]
          %v1359 = vld [vmem:[#allocation2 + $0xe0] sm:$0xff]
          %v1360 = vld [vmem:[#allocation2 + $0xe8] sm:$0xff]
          %v1361 = vld [vmem:[#allocation2 + $0xf0] sm:$0xff]
          %v1362 = vld [vmem:[#allocation2 + $0xf8] sm:$0xff]
          %v1363 = vld [vmem:[%s2] sm:$0x1]
          %v1365 = vlaneseq
          %v1366 = vshrl.u32 %v1365, 7
          %v1367 = vsub.s32 0, %v1366
          %v1368 = vrot.slane %v1363, %v1367
          %v1370 = vadd.f32 %v1331, %v1368
          %v1371 = vadd.f32 %v1332, %v1368
          %v1372 = vadd.f32 %v1333, %v1368
          %v1373 = vadd.f32 %v1334, %v1368
          %v1374 = vadd.f32 %v1335, %v1368
          %v1375 = vadd.f32 %v1336, %v1368
          %v1376 = vadd.f32 %v1337, %v1368
          %v1377 = vadd.f32 %v1338, %v1368
          %v1378 = vadd.f32 %v1339, %v1368
          %v1379 = vadd.f32 %v1340, %v1368
          %v1380 = vadd.f32 %v1341, %v1368
          %v1381 = vadd.f32 %v1342, %v1368
          %v1382 = vadd.f32 %v1343, %v1368
          %v1383 = vadd.f32 %v1344, %v1368
          %v1384 = vadd.f32 %v1345, %v1368
          %v1385 = vadd.f32 %v1346, %v1368
          %v1386 = vadd.f32 %v1347, %v1368
          %v1387 = vadd.f32 %v1348, %v1368
          %v1388 = vadd.f32 %v1349, %v1368
          %v1389 = vadd.f32 %v1350, %v1368
          %v1390 = vadd.f32 %v1351, %v1368
          %v1391 = vadd.f32 %v1352, %v1368
          %v1392 = vadd.f32 %v1353, %v1368
          %v1393 = vadd.f32 %v1354, %v1368
          %v1394 = vadd.f32 %v1355, %v1368
          %v1395 = vadd.f32 %v1356, %v1368
          %v1396 = vadd.f32 %v1357, %v1368
          %v1397 = vadd.f32 %v1358, %v1368
          %v1398 = vadd.f32 %v1359, %v1368
          %v1399 = vadd.f32 %v1360, %v1368
          %v1400 = vadd.f32 %v1361, %v1368
          %v1401 = vadd.f32 %v1362, %v1368
          %vm1402 = vcmp.ge.f32.partialorder %v1370, 0.0
          %vm1403 = vcmp.ge.f32.partialorder %v1371, 0.0
          %vm1404 = vcmp.ge.f32.partialorder %v1372, 0.0
          %vm1405 = vcmp.ge.f32.partialorder %v1373, 0.0
          %vm1406 = vcmp.ge.f32.partialorder %v1374, 0.0
          %vm1407 = vcmp.ge.f32.partialorder %v1375, 0.0
          %vm1408 = vcmp.ge.f32.partialorder %v1376, 0.0
          %vm1409 = vcmp.ge.f32.partialorder %v1377, 0.0
          %vm1410 = vcmp.ge.f32.partialorder %v1378, 0.0
          %vm1411 = vcmp.ge.f32.partialorder %v1379, 0.0
          %vm1412 = vcmp.ge.f32.partialorder %v1380, 0.0
          %vm1413 = vcmp.ge.f32.partialorder %v1381, 0.0
          %vm1414 = vcmp.ge.f32.partialorder %v1382, 0.0
          %vm1415 = vcmp.ge.f32.partialorder %v1383, 0.0
          %vm1416 = vcmp.ge.f32.partialorder %v1384, 0.0
          %vm1417 = vcmp.ge.f32.partialorder %v1385, 0.0
          %vm1418 = vcmp.ge.f32.partialorder %v1386, 0.0
          %vm1419 = vcmp.ge.f32.partialorder %v1387, 0.0
          %vm1420 = vcmp.ge.f32.partialorder %v1388, 0.0
          %vm1421 = vcmp.ge.f32.partialorder %v1389, 0.0
          %vm1422 = vcmp.ge.f32.partialorder %v1390, 0.0
          %vm1423 = vcmp.ge.f32.partialorder %v1391, 0.0
          %vm1424 = vcmp.ge.f32.partialorder %v1392, 0.0
          %vm1425 = vcmp.ge.f32.partialorder %v1393, 0.0
          %vm1426 = vcmp.ge.f32.partialorder %v1394, 0.0
          %vm1427 = vcmp.ge.f32.partialorder %v1395, 0.0
          %vm1428 = vcmp.ge.f32.partialorder %v1396, 0.0
          %vm1429 = vcmp.ge.f32.partialorder %v1397, 0.0
          %vm1430 = vcmp.ge.f32.partialorder %v1398, 0.0
          %vm1431 = vcmp.ge.f32.partialorder %v1399, 0.0
          %vm1432 = vcmp.ge.f32.partialorder %v1400, 0.0
          %vm1433 = vcmp.ge.f32.partialorder %v1401, 0.0
          %v1434 = vmul.f32 %v1370, 0.1
          %v1435 = vmul.f32 %v1371, 0.1
          %v1436 = vmul.f32 %v1372, 0.1
          %v1437 = vmul.f32 %v1373, 0.1
          %v1438 = vmul.f32 %v1374, 0.1
          %v1439 = vmul.f32 %v1375, 0.1
          %v1440 = vmul.f32 %v1376, 0.1
          %v1441 = vmul.f32 %v1377, 0.1
          %v1442 = vmul.f32 %v1378, 0.1
          %v1443 = vmul.f32 %v1379, 0.1
          %v1444 = vmul.f32 %v1380, 0.1
          %v1445 = vmul.f32 %v1381, 0.1
          %v1446 = vmul.f32 %v1382, 0.1
          %v1447 = vmul.f32 %v1383, 0.1
          %v1448 = vmul.f32 %v1384, 0.1
          %v1449 = vmul.f32 %v1385, 0.1
          %v1450 = vmul.f32 %v1386, 0.1
          %v1451 = vmul.f32 %v1387, 0.1
          %v1452 = vmul.f32 %v1388, 0.1
          %v1453 = vmul.f32 %v1389, 0.1
          %v1454 = vmul.f32 %v1390, 0.1
          %v1455 = vmul.f32 %v1391, 0.1
          %v1456 = vmul.f32 %v1392, 0.1
          %v1457 = vmul.f32 %v1393, 0.1
          %v1458 = vmul.f32 %v1394, 0.1
          %v1459 = vmul.f32 %v1395, 0.1
          %v1460 = vmul.f32 %v1396, 0.1
          %v1461 = vmul.f32 %v1397, 0.1
          %v1462 = vmul.f32 %v1398, 0.1
          %v1463 = vmul.f32 %v1399, 0.1
          %v1464 = vmul.f32 %v1400, 0.1
          %v1465 = vmul.f32 %v1401, 0.1
          %v1466 = vsel %vm1402, %v1370, %v1434
          %v1467 = vsel %vm1403, %v1371, %v1435
          %v1468 = vsel %vm1404, %v1372, %v1436
          %v1469 = vsel %vm1405, %v1373, %v1437
          %v1470 = vsel %vm1406, %v1374, %v1438
          %v1471 = vsel %vm1407, %v1375, %v1439
          %v1472 = vsel %vm1408, %v1376, %v1440
          %v1473 = vsel %vm1409, %v1377, %v1441
          %v1474 = vsel %vm1410, %v1378, %v1442
          %v1475 = vsel %vm1411, %v1379, %v1443
          %v1476 = vsel %vm1412, %v1380, %v1444
          %v1477 = vsel %vm1413, %v1381, %v1445
          %v1478 = vsel %vm1414, %v1382, %v1446
          %v1479 = vsel %vm1415, %v1383, %v1447
          %v1480 = vsel %vm1416, %v1384, %v1448
          %v1481 = vsel %vm1417, %v1385, %v1449
          %v1482 = vsel %vm1418, %v1386, %v1450
          %v1483 = vsel %vm1419, %v1387, %v1451
          %v1484 = vsel %vm1420, %v1388, %v1452
          %v1485 = vsel %vm1421, %v1389, %v1453
          %v1486 = vsel %vm1422, %v1390, %v1454
          %v1487 = vsel %vm1423, %v1391, %v1455
          %v1488 = vsel %vm1424, %v1392, %v1456
          %v1489 = vsel %vm1425, %v1393, %v1457
          %v1490 = vsel %vm1426, %v1394, %v1458
          %v1491 = vsel %vm1427, %v1395, %v1459
          %v1492 = vsel %vm1428, %v1396, %v1460
          %v1493 = vsel %vm1429, %v1397, %v1461
          %v1494 = vsel %vm1430, %v1398, %v1462
          %v1495 = vsel %vm1431, %v1399, %v1463
          %v1496 = vsel %vm1432, %v1400, %v1464
          %v1497 = vsel %vm1433, %v1401, %v1465
          %1498 = vst [vmem:[%s228] sm:$0xff] %v1466
          %1499 = vst [vmem:[%s228 + $0x8] sm:$0xff] %v1467
          %1500 = vst [vmem:[%s228 + $0x10] sm:$0xff] %v1468
          %1501 = vst [vmem:[%s228 + $0x18] sm:$0xff] %v1469
          %1502 = vst [vmem:[%s228 + $0x20] sm:$0xff] %v1470
          %1503 = vst [vmem:[%s228 + $0x28] sm:$0xff] %v1471
          %1504 = vst [vmem:[%s228 + $0x30] sm:$0xff] %v1472
          %1505 = vst [vmem:[%s228 + $0x38] sm:$0xff] %v1473
          %1506 = vst [vmem:[%s228 + $0x40] sm:$0xff] %v1474
          %1507 = vst [vmem:[%s228 + $0x48] sm:$0xff] %v1475
          %1508 = vst [vmem:[%s228 + $0x50] sm:$0xff] %v1476
          %1509 = vst [vmem:[%s228 + $0x58] sm:$0xff] %v1477
          %1510 = vst [vmem:[%s228 + $0x60] sm:$0xff] %v1478
          %1511 = vst [vmem:[%s228 + $0x68] sm:$0xff] %v1479
          %1512 = vst [vmem:[%s228 + $0x70] sm:$0xff] %v1480
          %1513 = vst [vmem:[%s228 + $0x78] sm:$0xff] %v1481
          %1514 = vst [vmem:[%s228 + $0x80] sm:$0xff] %v1482
          %1515 = vst [vmem:[%s228 + $0x88] sm:$0xff] %v1483
          %1516 = vst [vmem:[%s228 + $0x90] sm:$0xff] %v1484
          %1517 = vst [vmem:[%s228 + $0x98] sm:$0xff] %v1485
          %1518 = vst [vmem:[%s228 + $0xa0] sm:$0xff] %v1486
          %1519 = vst [vmem:[%s228 + $0xa8] sm:$0xff] %v1487
          %1520 = vst [vmem:[%s228 + $0xb0] sm:$0xff] %v1488
          %1521 = vst [vmem:[%s228 + $0xb8] sm:$0xff] %v1489
          %1522 = vst [vmem:[%s228 + $0xc0] sm:$0xff] %v1490
          %1523 = vst [vmem:[%s228 + $0xc8] sm:$0xff] %v1491
          %1524 = vst [vmem:[%s228 + $0xd0] sm:$0xff] %v1492
          %1525 = vst [vmem:[%s228 + $0xd8] sm:$0xff] %v1493
          %1526 = vst [vmem:[%s228 + $0xe0] sm:$0xff] %v1494
          %1527 = vst [vmem:[%s228 + $0xe8] sm:$0xff] %v1495
          %1528 = vst [vmem:[%s228 + $0xf0] sm:$0xff] %v1496
          %1529 = vst [vmem:[%s228 + $0xf8] sm:$0xff] %v1497
        $region48: #{tpu_custom_call.1} parent=31 // pred_fallthru
          _
        %s1530 = sand.u32 %s116, 1
        %s1531 = scalar_lea.sflag [#allocation5], %s1530
        %s1532 = sand.u32 %s116, 1
        %s1533 = smul.addr %s1532, 256
        %s1534 = scalar_lea.vmem [#allocation8], %s1533
        // Predicated region
        $region49: #{tpu_custom_call.1} parent=31 // pred_check
          %p1535 = pneg %p126
        $region50: #{tpu_custom_call.1} parent=31 // pred_check_branch
          %1537 = sbr.rel (%p1535) target = $region52
        $region51: #{tpu_custom_call.1} parent=31 // pred_region
          %s1538 = smul.u32 32, %s25
          %s1540 = ssub.s32 4096, 4096
          %1541 = vsyncadd %s1531, %s1540
          %s1542 = smul.addr %s1538, 128
          %s1543 = scalar_lea.hbm %s3, %s1542
          %s1544 = sshll.u32 %s1534, 4
          %s1545 = int_to_ptr.vmem [resolvable:$true] %s1544
          %1550 = dma.vmem_to_hbm [thread:$0]  %s1545, 4096, %s1543, %s1531, 128, 128, 8
        $region52: #{tpu_custom_call.1} parent=31 // pred_fallthru
          _
      $region32: #{tpu_custom_call.1} parent=5 // pred_fallthru
        _
      %p1551 = scmp.le.s32.totalorder 2, %s16
      // Predicated region
      $region53: #{tpu_custom_call.1} parent=5 // pred_check
        %p1552 = pneg %p1551
      $region54: #{tpu_custom_call.1} parent=5 // pred_check_branch
        %1554 = sbr.rel (%p1552) target = $region56
      $region55: #{tpu_custom_call.1} parent=5 // pred_region
        %s1555 = ssub.s32 %s16, 2
        // Predicated region
        $region57: #{tpu_custom_call.1} parent=55 // pred_check
          %p1556 = pneg %p132
        $region58: #{tpu_custom_call.1} parent=55 // pred_check_branch
          %1558 = sbr.rel (%p1556) target = $region60
        $region59: #{tpu_custom_call.1} parent=55 // pred_region
          %s1559 = sand.u32 %s117, 1
          %s1560 = scalar_lea.sflag [#allocation5], %s1559
          %s1561 = sand.u32 %s117, 1
          %s1562 = smul.addr %s1561, 256
          %s1563 = scalar_lea.vmem [#allocation8], %s1562
          %1564 = dma.done %s1560, 4096
        $region60: #{tpu_custom_call.1} parent=55 // pred_fallthru
          _
      $region56: #{tpu_custom_call.1} parent=5 // pred_fallthru
        _
    $region6: #{tpu_custom_call.1} parent=1 // loop_footer
      %s20 = sadd.s32 1, %s16
    $region7: #{tpu_custom_call.1} parent=1 // loop_footer_branch
      %15 = sbr.rel target = $region3
    $region8: #{tpu_custom_call.1} parent=1 // loop_exit
      _
    %1565 = vsyncpa [#allocation4], 1
    %s1566 = scalar_lea.sflag [#allocation4], 1
    %1567 = vsyncpa %s1566, 1
    %1568 = vsyncpa [#allocation7], 1
    %1569 = vsyncpa [#allocation5], 1
    %s1570 = scalar_lea.sflag [#allocation5], 1
    %1571 = vsyncpa %s1570, 1

</llo_original>
